<compile_context>
chip_gen: v7x
topology: tpu7x:2x2x1
jax: 0.10.0
libtpu: 0.0.40
codegen_flags: <defaults>
</compile_context>

<pallas_src>
import jax
import jax.numpy as jnp
from jax import lax
from jax.experimental import pallas as pl
from jax.experimental.pallas import tpu as pltpu


# --------------------------------------------------------------------------
# Per-generation VMEM budget + tile selection
# --------------------------------------------------------------------------
def _vmem_capacity_bytes():
    try:
        info = pltpu.get_tpu_info()
        cap = getattr(info, "vmem_capacity_bytes", None)
        if cap:
            return int(cap)
    except Exception:
        pass
    return 128 * 1024 * 1024  # v5e / v6e default


def _pass2_vmem_estimate(tq, tk, D, D4, H, Dh, wbuf):
    """Rough per-step VMEM footprint of the attention+FFN pass (bytes)."""
    lane = 128
    dhp = -(-Dh // lane) * lane            # lane-padded head dim
    tkp = -(-tk // lane) * lane
    weights = 2 * wbuf * (D * D + 2 * D * D4)          # wo + wf1 + wf2 (bf16)
    biases = 4 * 2 * (6 * D + D4)
    streamed = 2 * (2 * H * tq * dhp                    # q tile (bf16, 2 bufs)
                    + 2 * 2 * H * tk * dhp              # k + v tiles
                    + 4 * tq * D                        # x residual (f32)
                    + 4 * tq * D)                       # output (f32)
    scratch = 4 * (2 * H * tq + H * tq * dhp) + 2 * tq * D
    live = 3 * 4 * H * tq * tkp + 4 * tq * D4 + 2 * 4 * tq * D
    return weights + biases + streamed + scratch + live


def _choose_tiles(T, D, D4, H, Dh, budget, wbuf):
    """Largest (TQ, TK) dividing T whose estimated footprint fits the budget."""
    cands = [c for c in (512, 256, 128, 64, 32, 16, 8) if T % c == 0]
    if not cands:
        cands = [T]
    for tq in cands:
        for tk in cands:
            if _pass2_vmem_estimate(tq, tk, D, D4, H, Dh, wbuf) <= budget:
                return tq, tk
    return cands[-1], cands[-1]


# --------------------------------------------------------------------------
# Pass 1: fused QKV projection, head-major output (no wrapper transpose)
# --------------------------------------------------------------------------
def qkv_proj_kernel(x_ref, w_ref, b_ref, q_ref, k_ref, v_ref):
    # x_ref: (1, TQ, D) f32, w_ref: (D, 3D) bf16, b_ref: (1, 3D) f32
    # q/k/v_ref: (1, H, TQ, Dh) bf16   (1/sqrt(Dh) pre-folded into Q)
    D = x_ref.shape[2]
    H, Dh = q_ref.shape[1], q_ref.shape[3]

    x = x_ref[0].astype(jnp.bfloat16)
    acc = jnp.dot(x, w_ref[...], preferred_element_type=jnp.float32) + b_ref[...]
    acc = acc.astype(jnp.bfloat16)                      # (TQ, 3D), head-major cols

    # Head split via static lane slices (no in-kernel transpose op needed).
    for h in range(H):
        q_ref[0, h] = acc[:, h * Dh:(h + 1) * Dh]
        k_ref[0, h] = acc[:, D + h * Dh:D + (h + 1) * Dh]
        v_ref[0, h] = acc[:, 2 * D + h * Dh:2 * D + (h + 1) * Dh]


# --------------------------------------------------------------------------
# Pass 2: flash attention (online softmax over KV tiles) + residual + LN1
#         + FFN + residual + LN2
# --------------------------------------------------------------------------
def attn_ffn_kernel(
    qh_ref,                       # (1, H, TQ, Dh) bf16
    kh_ref, vh_ref,               # (1, H, TK, Dh) bf16
    x_ref,                        # (1, TQ, D)    residual input
    wo_ref, bo_ref,               # (D, D) bf16, (1, D) f32
    g1_ref, be1_ref,              # (1, D) f32
    wf1_ref, bf1_ref,             # (D, 4D) bf16, (1, 4D) f32
    wf2_ref, bf2_ref,             # (4D, D) bf16, (1, D) f32
    g2_ref, be2_ref,              # (1, D) f32
    o_ref,                        # (1, TQ, D)
    m_ref, l_ref, acc_ref,        # (H,TQ) f32, (H,TQ) f32, (H,TQ,Dh) f32
    oflat_ref,                    # (TQ, D) bf16  head-concat slab
):
    H, TQ, Dh = qh_ref.shape[1], qh_ref.shape[2], qh_ref.shape[3]
    TK = kh_ref.shape[2]
    eps = 1e-5

    qi = pl.program_id(1)
    ki = pl.program_id(2)
    q_start = qi * TQ
    k_start = ki * TK
    # Last KV tile intersecting the causal band for this q tile (<= nk-1).
    last_k = (q_start + TQ - 1) // TK

    @pl.when(ki == 0)
    def _init():
        m_ref[...] = jnp.full(m_ref.shape, -jnp.inf, dtype=m_ref.dtype)
        l_ref[...] = jnp.zeros(l_ref.shape, dtype=l_ref.dtype)
        acc_ref[...] = jnp.zeros(acc_ref.shape, dtype=acc_ref.dtype)

    # Skip KV tiles that lie entirely above the causal diagonal.
    @pl.when(k_start <= q_start + TQ - 1)
    def _update():
        q = qh_ref[0]                                   # (H, TQ, Dh) bf16
        k = kh_ref[0]                                   # (H, TK, Dh) bf16
        v = vh_ref[0]                                   # (H, TK, Dh) bf16

        s = jnp.einsum("hqd,hkd->hqk", q, k,
                       preferred_element_type=jnp.float32)     # (H,TQ,TK) f32
        row = lax.broadcasted_iota(jnp.int32, (TQ, TK), 0) + q_start
        col = lax.broadcasted_iota(jnp.int32, (TQ, TK), 1) + k_start
        # Finite additive causal bias (diagonal always unmasked -> no 0/0).
        bias = jnp.where(col <= row, jnp.float32(0.0), jnp.float32(-1e30))
        s = s + bias[None]

        m_prev = m_ref[...]                             # (H, TQ)
        m_new = jnp.maximum(m_prev, jnp.max(s, axis=-1))
        alpha = jnp.exp(m_prev - m_new)
        # TODO(synk): on v6e/v7x compute p in bf16 (native bf16 EUP) to halve
        #             exp/store traffic; keep f32 on v5e.
        p = jnp.exp(s - m_new[:, :, None])              # (H, TQ, TK) f32
        l_ref[...] = alpha * l_ref[...] + jnp.sum(p, axis=-1)
        acc_ref[...] = alpha[:, :, None] * acc_ref[...] + jnp.einsum(
            "hqk,hkd->hqd", p.astype(jnp.bfloat16), v,
            preferred_element_type=jnp.float32)
        m_ref[...] = m_new

    # Finalize at the last needed KV tile (later tiles are fully masked).
    @pl.when(ki == last_k)
    def _finalize():
        # ~2^-12 rel. error from approx reciprocal; within tolerance
        # (use approx=False for tighter parity with the f32 reference).
        inv_l = pl.reciprocal(l_ref[...], approx=True)          # (H, TQ)
        o_h = (acc_ref[...] * inv_l[:, :, None]).astype(jnp.bfloat16)

        # Relayout per-head results into a lane-dense (TQ, H*Dh) slab, then a
        # single full-K (TQ,D)x(D,D) output projection on the MXU.
        for h in range(H):
            oflat_ref[:, h * Dh:(h + 1) * Dh] = o_h[h]
        attn = jnp.dot(oflat_ref[...], wo_ref[...],
                       preferred_element_type=jnp.float32) + bo_ref[...]

        # ---- residual + layer norm 1 (f32 stats) ----
        x = x_ref[0].astype(jnp.float32)
        x1 = attn + x
        mu = jnp.mean(x1, axis=-1, keepdims=True)
        var = jnp.mean((x1 - mu) ** 2, axis=-1, keepdims=True)
        xn1 = (x1 - mu) * lax.rsqrt(var + eps) * g1_ref[...] + be1_ref[...]

        # ---- feed-forward (bf16 matmuls, f32 accumulation) ----
        # TODO(synk): stream wf1/wf2 over the 4D hidden dim for D >= ~1536.
        h1 = jnp.dot(xn1.astype(jnp.bfloat16), wf1_ref[...],
                     preferred_element_type=jnp.float32) + bf1_ref[...]
        h1 = jnp.maximum(h1, 0.0)
        h2 = jnp.dot(h1.astype(jnp.bfloat16), wf2_ref[...],
                     preferred_element_type=jnp.float32) + bf2_ref[...]

        # ---- residual + layer norm 2 ----
        x2 = h2 + xn1
        mu2 = jnp.mean(x2, axis=-1, keepdims=True)
        var2 = jnp.mean((x2 - mu2) ** 2, axis=-1, keepdims=True)
        out = (x2 - mu2) * lax.rsqrt(var2 + eps) * g2_ref[...] + be2_ref[...]
        o_ref[0] = out.astype(o_ref.dtype)


# --------------------------------------------------------------------------
# Host-side weight packing — hoisted out of the per-call path (call ONCE).
# --------------------------------------------------------------------------
def prepare_decoder_weights(params):
    H, D, Dh = params["wq"].shape
    scale = 1.0 / float(Dh) ** 0.5

    def pack_heads(w):  # (H, D, Dh) -> (D, H*Dh), concat-by-head column order
        return jnp.transpose(w, (1, 0, 2)).reshape(D, H * Dh)

    wq = pack_heads(params["wq"]) * scale        # fold 1/sqrt(Dh) into Q
    wk = pack_heads(params["wk"])
    wv = pack_heads(params["wv"])
    w_qkv = jnp.concatenate([wq, wk, wv], axis=1).astype(jnp.bfloat16)  # (D,3D)

    bq = params["bq"].reshape(1, D) * scale
    bk = params["bk"].reshape(1, D)
    bv = params["bv"].reshape(1, D)
    b_qkv = jnp.concatenate([bq, bk, bv], axis=1).astype(jnp.float32)   # (1,3D)

    return {
        "w_qkv": w_qkv, "b_qkv": b_qkv,
        "wo": params["wo"].astype(jnp.bfloat16),
        "bo": params["bo"].astype(jnp.float32).reshape(1, D),
        "g1": params["g1"].astype(jnp.float32).reshape(1, D),
        "be1": params["be1"].astype(jnp.float32).reshape(1, D),
        "wf1": params["wf1"].astype(jnp.bfloat16),
        "bf1": params["bf1"].astype(jnp.float32).reshape(1, -1),
        "wf2": params["wf2"].astype(jnp.bfloat16),
        "bf2": params["bf2"].astype(jnp.float32).reshape(1, D),
        "g2": params["g2"].astype(jnp.float32).reshape(1, D),
        "be2": params["be2"].astype(jnp.float32).reshape(1, D),
        "num_heads": int(H), "head_dim": int(Dh),
    }


# --------------------------------------------------------------------------
# Wrapper
# --------------------------------------------------------------------------
def decoder_block(x, w, *, weight_buffers=1):
    B, T, D = x.shape
    H, Dh = w["num_heads"], w["head_dim"]
    D3 = 3 * D
    D4 = w["wf1"].shape[1]

    vmem_cap = _vmem_capacity_bytes()
    vmem_limit = int(vmem_cap * 0.75)               # per-generation budget
    tile_budget = int(vmem_limit * 0.8)             # ~25% headroom for tiles
    TQ, TK = _choose_tiles(T, D, D4, H, Dh, tile_budget, weight_buffers)
    nq, nk = T // TQ, T // TK

    def const_spec(shape):
        imap = lambda *_: (0,) * len(shape)
        if weight_buffers == 1:
            # Single-buffer blocks whose index never changes (weights/biases).
            return pl.BlockSpec(shape, imap, pipeline_mode=pl.Buffered(1))
        return pl.BlockSpec(shape, imap)

    cp2 = pltpu.CompilerParams(
        dimension_semantics=("parallel", "parallel"),
        vmem_limit_bytes=vmem_limit)
    cp3 = pltpu.CompilerParams(
        dimension_semantics=("parallel", "parallel", "arbitrary"),
        vmem_limit_bytes=vmem_limit)

    # ---- pass 1: fused QKV projection, head-major outputs ----
    head_shape = jax.ShapeDtypeStruct((B, H, T, Dh), jnp.bfloat16)
    qh, kh, vh = pl.pallas_call(
        qkv_proj_kernel,
        out_shape=(head_shape, head_shape, head_shape),
        grid_spec=pltpu.PrefetchScalarGridSpec(
            num_scalar_prefetch=0,
            grid=(B, nq),
            in_specs=[
                pl.BlockSpec((1, TQ, D), lambda b, q: (b, q, 0)),
                const_spec((D, D3)),
                const_spec((1, D3)),
            ],
            out_specs=(
                pl.BlockSpec((1, H, TQ, Dh), lambda b, q: (b, 0, q, 0)),
                pl.BlockSpec((1, H, TQ, Dh), lambda b, q: (b, 0, q, 0)),
                pl.BlockSpec((1, H, TQ, Dh), lambda b, q: (b, 0, q, 0)),
            ),
        ),
        compiler_params=cp2,
    )(x, w["w_qkv"], w["b_qkv"])

    # ---- pass 2: flash attention + residual + LN1 + FFN + residual + LN2 ----
    # Grid order: B outer, q-tile middle, KV reduction innermost ("arbitrary").
    # KV index clamp: tiles above the causal diagonal map to the previous block
    # index so the pipeline skips their DMA (compute is skipped in-kernel).
    def kv_imap(b, qi, ki):
        return (b, 0, jnp.minimum(ki, (qi * TQ + TQ - 1) // TK), 0)

    out = pl.pallas_call(
        attn_ffn_kernel,
        out_shape=jax.ShapeDtypeStruct((B, T, D), x.dtype),
        grid_spec=pltpu.PrefetchScalarGridSpec(
            num_scalar_prefetch=0,
            grid=(B, nq, nk),
            in_specs=[
                pl.BlockSpec((1, H, TQ, Dh), lambda b, qi, ki: (b, 0, qi, 0)),
                pl.BlockSpec((1, H, TK, Dh), kv_imap),
                pl.BlockSpec((1, H, TK, Dh), kv_imap),
                pl.BlockSpec((1, TQ, D), lambda b, qi, ki: (b, qi, 0)),
                const_spec((D, D)),       # wo
                const_spec((1, D)),       # bo
                const_spec((1, D)),       # g1
                const_spec((1, D)),       # be1
                const_spec((D, D4)),      # wf1
                const_spec((1, D4)),      # bf1
                const_spec((D4, D)),      # wf2
                const_spec((1, D)),       # bf2
                const_spec((1, D)),       # g2
                const_spec((1, D)),       # be2
            ],
            out_specs=pl.BlockSpec((1, TQ, D), lambda b, qi, ki: (b, qi, 0)),
            scratch_shapes=[
                pltpu.VMEM((H, TQ), jnp.float32),       # m
                pltpu.VMEM((H, TQ), jnp.float32),       # l
                pltpu.VMEM((H, TQ, Dh), jnp.float32),   # acc
                pltpu.VMEM((TQ, D), jnp.bfloat16),      # head-concat slab
            ],
        ),
        compiler_params=cp3,
    )(qh, kh, vh, x, w["wo"], w["bo"], w["g1"], w["be1"],
      w["wf1"], w["bf1"], w["wf2"], w["bf2"], w["g2"], w["be2"])
    return out


# --------------------------------------------------------------------------
# Params + pure-JAX reference (mirrors the PyTorch forward, f32)
# --------------------------------------------------------------------------
def init_params(key, dim, num_heads):
    dh = dim // num_heads
    ks = jax.random.split(key, 12)
    s = 0.05
    return {
        "wq": jax.random.normal(ks[0], (num_heads, dim, dh), jnp.float32) * s,
        "bq": jax.random.normal(ks[1], (num_heads, 1, dh), jnp.float32) * s,
        "wk": jax.random.normal(ks[2], (num_heads, dim, dh), jnp.float32) * s,
        "bk": jax.random.normal(ks[3], (num_heads, 1, dh), jnp.float32) * s,
        "wv": jax.random.normal(ks[4], (num_heads, dim, dh), jnp.float32) * s,
        "bv": jax.random.normal(ks[5], (num_heads, 1, dh), jnp.float32) * s,
        "wo": jax.random.normal(ks[6], (dim, dim), jnp.float32) * s,
        "bo": jax.random.normal(ks[7], (1, dim), jnp.float32) * s,
        "g1": jnp.ones((1, dim), jnp.float32),
        "be1": jnp.zeros((1, dim), jnp.float32),
        "wf1": jax.random.normal(ks[8], (dim, 4 * dim), jnp.float32) * s,
        "bf1": jax.random.normal(ks[9], (1, 4 * dim), jnp.float32) * s,
        "wf2": jax.random.normal(ks[10], (4 * dim, dim), jnp.float32) * s,
        "bf2": jax.random.normal(ks[11], (1, dim), jnp.float32) * s,
        "g2": jnp.ones((1, dim), jnp.float32),
        "be2": jnp.zeros((1, dim), jnp.float32),
    }


def decoder_block_ref(x, p):
    B, T, D = x.shape
    H, _, Dh = p["wq"].shape
    causal = jnp.tril(jnp.ones((T, T), bool))
    heads = []
    for h in range(H):
        q = x @ p["wq"][h] + p["bq"][h]
        k = x @ p["wk"][h] + p["bk"][h]
        v = x @ p["wv"][h] + p["bv"][h]
        s = jnp.einsum("btd,bsd->bts", q, k) / jnp.sqrt(jnp.float32(Dh))
        s = jnp.where(causal[None], s, -jnp.inf)
        heads.append(jnp.einsum("bts,bsd->btd", jax.nn.softmax(s, axis=-1), v))
    attn = jnp.concatenate(heads, axis=-1) @ p["wo"] + p["bo"]
    x1 = attn + x

    def ln(z, g, b):
        mu = jnp.mean(z, -1, keepdims=True)
        var = jnp.mean((z - mu) ** 2, -1, keepdims=True)
        return (z - mu) * lax.rsqrt(var + 1e-5) * g + b

    xn1 = ln(x1, p["g1"], p["be1"])
    ff = jnp.maximum(xn1 @ p["wf1"] + p["bf1"], 0.0) @ p["wf2"] + p["bf2"]
    return ln(ff + xn1, p["g2"], p["be2"])


if __name__ == "__main__":
    B, T, D, H = 2, 8, 32, 4
    key = jax.random.PRNGKey(0)
    kx, kp = jax.random.split(key)
    x = jax.random.normal(kx, (B, T, D), jnp.float32)
    params = init_params(kp, D, H)
    packed = prepare_decoder_weights(params)   # hoisted: once per weight set

    def run(wbuf):
        return jax.block_until_ready(decoder_block(x, packed, weight_buffers=wbuf))

    try:
        out = run(1)        # single-buffered constant weight blocks (v7x VMEM)
    except Exception:
        out = run(2)        # fall back to default double buffering

    ref = decoder_block_ref(x, params)
    assert out.shape == (B, T, D)
    max_err = float(jnp.max(jnp.abs(out - ref)))
    # bf16 matmul operands with f32 accumulation vs f32 reference.
    assert jnp.allclose(out, ref, atol=3e-2, rtol=3e-2), max_err

    print("KERNEL_OK")
</pallas_src>

<mosaic_0001>
module attributes {stable_mosaic.version = 11 : i64} {
  func.func @qkv_proj_kernel(%arg0: i32, %arg1: i32, %arg2: memref<1x8x32xf32, #tpu.memory_space<vmem>>, %arg3: memref<32x96xbf16, #tpu.memory_space<vmem>>, %arg4: memref<1x96xf32, #tpu.memory_space<vmem>>, %arg5: memref<1x4x8x8xbf16, #tpu.memory_space<vmem>>, %arg6: memref<1x4x8x8xbf16, #tpu.memory_space<vmem>>, %arg7: memref<1x4x8x8xbf16, #tpu.memory_space<vmem>>) attributes {dimension_semantics = [#tpu.dimension_semantics<parallel>, #tpu.dimension_semantics<parallel>], iteration_bounds = array<i64: 2, 1>, scalar_prefetch = 0 : i64, scratch_operands = 0 : i64, tpu.core_type = #tpu.core_type<tc>, window_params = [{transform_indices = @transform_0, window_bounds = array<i64: 1, 8, 32>}, {pipeline_mode = #tpu.pipeline_mode<synchronous>, transform_indices = @transform_1, window_bounds = array<i64: 32, 96>}, {pipeline_mode = #tpu.pipeline_mode<synchronous>, transform_indices = @transform_2, window_bounds = array<i64: 1, 96>}, {transform_indices = @transform_3, window_bounds = array<i64: 1, 4, 8, 8>}, {transform_indices = @transform_4, window_bounds = array<i64: 1, 4, 8, 8>}, {transform_indices = @transform_5, window_bounds = array<i64: 1, 4, 8, 8>}]} {
    %c0 = arith.constant 0 : index
    %c0_0 = arith.constant 0 : index
    %c0_1 = arith.constant 0 : index
    %0 = vector.load %arg2[%c0, %c0_0, %c0_1] : memref<1x8x32xf32, #tpu.memory_space<vmem>>, vector<1x8x32xf32>
    %1 = vector.shape_cast %0 : vector<1x8x32xf32> to vector<8x32xf32>
    %2 = arith.truncf %1 : vector<8x32xf32> to vector<8x32xbf16>
    %c0_2 = arith.constant 0 : index
    %c0_3 = arith.constant 0 : index
    %3 = vector.load %arg3[%c0_2, %c0_3] : memref<32x96xbf16, #tpu.memory_space<vmem>>, vector<32x96xbf16>
    %cst = arith.constant dense<0.000000e+00> : vector<8x96xf32>
    %4 = tpu.matmul %2, %3, %cst {dimension_numbers = #tpu.dot_dimension_numbers<[1], [0], [0], [1], [0, 0, 1, 1], [], []>} : vector<8x32xbf16>, vector<32x96xbf16>, vector<8x96xf32> -> vector<8x96xf32>
    %c0_4 = arith.constant 0 : index
    %c0_5 = arith.constant 0 : index
    %5 = vector.load %arg4[%c0_4, %c0_5] : memref<1x96xf32, #tpu.memory_space<vmem>>, vector<1x96xf32>
    %6 = vector.broadcast %5 : vector<1x96xf32> to vector<8x96xf32>
    %7 = arith.addf %4, %6 : vector<8x96xf32>
    %8 = arith.truncf %7 : vector<8x96xf32> to vector<8x96xbf16>
    %9 = vector.extract_strided_slice %8 {offsets = [0, 0], sizes = [8, 8], strides = [1, 1]} : vector<8x96xbf16> to vector<8x8xbf16>
    %c0_6 = arith.constant 0 : index
    %c0_7 = arith.constant 0 : index
    %c0_8 = arith.constant 0 : index
    %c0_9 = arith.constant 0 : index
    %10 = vector.load %arg5[%c0_6, %c0_7, %c0_8, %c0_9] : memref<1x4x8x8xbf16, #tpu.memory_space<vmem>>, vector<1x1x8x8xbf16>
    %11 = vector.shape_cast %10 : vector<1x1x8x8xbf16> to vector<8x8xbf16>
    %12 = vector.shape_cast %9 : vector<8x8xbf16> to vector<1x1x8x8xbf16>
    tpu.vector_store %arg5[%c0_6, %c0_7, %c0_8, %c0_9], %12 {strides = array<i32>} : memref<1x4x8x8xbf16, #tpu.memory_space<vmem>>, vector<1x1x8x8xbf16>,
    %13 = vector.extract_strided_slice %8 {offsets = [0, 32], sizes = [8, 8], strides = [1, 1]} : vector<8x96xbf16> to vector<8x8xbf16>
    %c0_10 = arith.constant 0 : index
    %c0_11 = arith.constant 0 : index
    %c0_12 = arith.constant 0 : index
    %c0_13 = arith.constant 0 : index
    %14 = vector.load %arg6[%c0_10, %c0_11, %c0_12, %c0_13] : memref<1x4x8x8xbf16, #tpu.memory_space<vmem>>, vector<1x1x8x8xbf16>
    %15 = vector.shape_cast %14 : vector<1x1x8x8xbf16> to vector<8x8xbf16>
    %16 = vector.shape_cast %13 : vector<8x8xbf16> to vector<1x1x8x8xbf16>
    tpu.vector_store %arg6[%c0_10, %c0_11, %c0_12, %c0_13], %16 {strides = array<i32>} : memref<1x4x8x8xbf16, #tpu.memory_space<vmem>>, vector<1x1x8x8xbf16>,
    %17 = vector.extract_strided_slice %8 {offsets = [0, 64], sizes = [8, 8], strides = [1, 1]} : vector<8x96xbf16> to vector<8x8xbf16>
    %c0_14 = arith.constant 0 : index
    %c0_15 = arith.constant 0 : index
    %c0_16 = arith.constant 0 : index
    %c0_17 = arith.constant 0 : index
    %18 = vector.load %arg7[%c0_14, %c0_15, %c0_16, %c0_17] : memref<1x4x8x8xbf16, #tpu.memory_space<vmem>>, vector<1x1x8x8xbf16>
    %19 = vector.shape_cast %18 : vector<1x1x8x8xbf16> to vector<8x8xbf16>
    %20 = vector.shape_cast %17 : vector<8x8xbf16> to vector<1x1x8x8xbf16>
    tpu.vector_store %arg7[%c0_14, %c0_15, %c0_16, %c0_17], %20 {strides = array<i32>} : memref<1x4x8x8xbf16, #tpu.memory_space<vmem>>, vector<1x1x8x8xbf16>,
    %21 = vector.extract_strided_slice %8 {offsets = [0, 8], sizes = [8, 8], strides = [1, 1]} : vector<8x96xbf16> to vector<8x8xbf16>
    %c0_18 = arith.constant 0 : index
    %c1 = arith.constant 1 : index
    %c0_19 = arith.constant 0 : index
    %c0_20 = arith.constant 0 : index
    %22 = vector.load %arg5[%c0_18, %c1, %c0_19, %c0_20] : memref<1x4x8x8xbf16, #tpu.memory_space<vmem>>, vector<1x1x8x8xbf16>
    %23 = vector.shape_cast %22 : vector<1x1x8x8xbf16> to vector<8x8xbf16>
    %24 = vector.shape_cast %21 : vector<8x8xbf16> to vector<1x1x8x8xbf16>
    tpu.vector_store %arg5[%c0_18, %c1, %c0_19, %c0_20], %24 {strides = array<i32>} : memref<1x4x8x8xbf16, #tpu.memory_space<vmem>>, vector<1x1x8x8xbf16>,
    %25 = vector.extract_strided_slice %8 {offsets = [0, 40], sizes = [8, 8], strides = [1, 1]} : vector<8x96xbf16> to vector<8x8xbf16>
    %c0_21 = arith.constant 0 : index
    %c1_22 = arith.constant 1 : index
    %c0_23 = arith.constant 0 : index
    %c0_24 = arith.constant 0 : index
    %26 = vector.load %arg6[%c0_21, %c1_22, %c0_23, %c0_24] : memref<1x4x8x8xbf16, #tpu.memory_space<vmem>>, vector<1x1x8x8xbf16>
    %27 = vector.shape_cast %26 : vector<1x1x8x8xbf16> to vector<8x8xbf16>
    %28 = vector.shape_cast %25 : vector<8x8xbf16> to vector<1x1x8x8xbf16>
    tpu.vector_store %arg6[%c0_21, %c1_22, %c0_23, %c0_24], %28 {strides = array<i32>} : memref<1x4x8x8xbf16, #tpu.memory_space<vmem>>, vector<1x1x8x8xbf16>,
    %29 = vector.extract_strided_slice %8 {offsets = [0, 72], sizes = [8, 8], strides = [1, 1]} : vector<8x96xbf16> to vector<8x8xbf16>
    %c0_25 = arith.constant 0 : index
    %c1_26 = arith.constant 1 : index
    %c0_27 = arith.constant 0 : index
    %c0_28 = arith.constant 0 : index
    %30 = vector.load %arg7[%c0_25, %c1_26, %c0_27, %c0_28] : memref<1x4x8x8xbf16, #tpu.memory_space<vmem>>, vector<1x1x8x8xbf16>
    %31 = vector.shape_cast %30 : vector<1x1x8x8xbf16> to vector<8x8xbf16>
    %32 = vector.shape_cast %29 : vector<8x8xbf16> to vector<1x1x8x8xbf16>
    tpu.vector_store %arg7[%c0_25, %c1_26, %c0_27, %c0_28], %32 {strides = array<i32>} : memref<1x4x8x8xbf16, #tpu.memory_space<vmem>>, vector<1x1x8x8xbf16>,
    %33 = vector.extract_strided_slice %8 {offsets = [0, 16], sizes = [8, 8], strides = [1, 1]} : vector<8x96xbf16> to vector<8x8xbf16>
    %c0_29 = arith.constant 0 : index
    %c2 = arith.constant 2 : index
    %c0_30 = arith.constant 0 : index
    %c0_31 = arith.constant 0 : index
    %34 = vector.load %arg5[%c0_29, %c2, %c0_30, %c0_31] : memref<1x4x8x8xbf16, #tpu.memory_space<vmem>>, vector<1x1x8x8xbf16>
    %35 = vector.shape_cast %34 : vector<1x1x8x8xbf16> to vector<8x8xbf16>
    %36 = vector.shape_cast %33 : vector<8x8xbf16> to vector<1x1x8x8xbf16>
    tpu.vector_store %arg5[%c0_29, %c2, %c0_30, %c0_31], %36 {strides = array<i32>} : memref<1x4x8x8xbf16, #tpu.memory_space<vmem>>, vector<1x1x8x8xbf16>,
    %37 = vector.extract_strided_slice %8 {offsets = [0, 48], sizes = [8, 8], strides = [1, 1]} : vector<8x96xbf16> to vector<8x8xbf16>
    %c0_32 = arith.constant 0 : index
    %c2_33 = arith.constant 2 : index
    %c0_34 = arith.constant 0 : index
    %c0_35 = arith.constant 0 : index
    %38 = vector.load %arg6[%c0_32, %c2_33, %c0_34, %c0_35] : memref<1x4x8x8xbf16, #tpu.memory_space<vmem>>, vector<1x1x8x8xbf16>
    %39 = vector.shape_cast %38 : vector<1x1x8x8xbf16> to vector<8x8xbf16>
    %40 = vector.shape_cast %37 : vector<8x8xbf16> to vector<1x1x8x8xbf16>
    tpu.vector_store %arg6[%c0_32, %c2_33, %c0_34, %c0_35], %40 {strides = array<i32>} : memref<1x4x8x8xbf16, #tpu.memory_space<vmem>>, vector<1x1x8x8xbf16>,
    %41 = vector.extract_strided_slice %8 {offsets = [0, 80], sizes = [8, 8], strides = [1, 1]} : vector<8x96xbf16> to vector<8x8xbf16>
    %c0_36 = arith.constant 0 : index
    %c2_37 = arith.constant 2 : index
    %c0_38 = arith.constant 0 : index
    %c0_39 = arith.constant 0 : index
    %42 = vector.load %arg7[%c0_36, %c2_37, %c0_38, %c0_39] : memref<1x4x8x8xbf16, #tpu.memory_space<vmem>>, vector<1x1x8x8xbf16>
    %43 = vector.shape_cast %42 : vector<1x1x8x8xbf16> to vector<8x8xbf16>
    %44 = vector.shape_cast %41 : vector<8x8xbf16> to vector<1x1x8x8xbf16>
    tpu.vector_store %arg7[%c0_36, %c2_37, %c0_38, %c0_39], %44 {strides = array<i32>} : memref<1x4x8x8xbf16, #tpu.memory_space<vmem>>, vector<1x1x8x8xbf16>,
    %45 = vector.extract_strided_slice %8 {offsets = [0, 24], sizes = [8, 8], strides = [1, 1]} : vector<8x96xbf16> to vector<8x8xbf16>
    %c0_40 = arith.constant 0 : index
    %c3 = arith.constant 3 : index
    %c0_41 = arith.constant 0 : index
    %c0_42 = arith.constant 0 : index
    %46 = vector.load %arg5[%c0_40, %c3, %c0_41, %c0_42] : memref<1x4x8x8xbf16, #tpu.memory_space<vmem>>, vector<1x1x8x8xbf16>
    %47 = vector.shape_cast %46 : vector<1x1x8x8xbf16> to vector<8x8xbf16>
    %48 = vector.shape_cast %45 : vector<8x8xbf16> to vector<1x1x8x8xbf16>
    tpu.vector_store %arg5[%c0_40, %c3, %c0_41, %c0_42], %48 {strides = array<i32>} : memref<1x4x8x8xbf16, #tpu.memory_space<vmem>>, vector<1x1x8x8xbf16>,
    %49 = vector.extract_strided_slice %8 {offsets = [0, 56], sizes = [8, 8], strides = [1, 1]} : vector<8x96xbf16> to vector<8x8xbf16>
    %c0_43 = arith.constant 0 : index
    %c3_44 = arith.constant 3 : index
    %c0_45 = arith.constant 0 : index
    %c0_46 = arith.constant 0 : index
    %50 = vector.load %arg6[%c0_43, %c3_44, %c0_45, %c0_46] : memref<1x4x8x8xbf16, #tpu.memory_space<vmem>>, vector<1x1x8x8xbf16>
    %51 = vector.shape_cast %50 : vector<1x1x8x8xbf16> to vector<8x8xbf16>
    %52 = vector.shape_cast %49 : vector<8x8xbf16> to vector<1x1x8x8xbf16>
    tpu.vector_store %arg6[%c0_43, %c3_44, %c0_45, %c0_46], %52 {strides = array<i32>} : memref<1x4x8x8xbf16, #tpu.memory_space<vmem>>, vector<1x1x8x8xbf16>,
    %53 = vector.extract_strided_slice %8 {offsets = [0, 88], sizes = [8, 8], strides = [1, 1]} : vector<8x96xbf16> to vector<8x8xbf16>
    %c0_47 = arith.constant 0 : index
    %c3_48 = arith.constant 3 : index
    %c0_49 = arith.constant 0 : index
    %c0_50 = arith.constant 0 : index
    %54 = vector.load %arg7[%c0_47, %c3_48, %c0_49, %c0_50] : memref<1x4x8x8xbf16, #tpu.memory_space<vmem>>, vector<1x1x8x8xbf16>
    %55 = vector.shape_cast %54 : vector<1x1x8x8xbf16> to vector<8x8xbf16>
    %56 = vector.shape_cast %53 : vector<8x8xbf16> to vector<1x1x8x8xbf16>
    tpu.vector_store %arg7[%c0_47, %c3_48, %c0_49, %c0_50], %56 {strides = array<i32>} : memref<1x4x8x8xbf16, #tpu.memory_space<vmem>>, vector<1x1x8x8xbf16>,
    return
  }
  func.func @transform_0(%arg0: i32, %arg1: i32) -> (i32, i32, i32) {
    %c0_i32 = arith.constant 0 : i32
    %c0_i32_0 = arith.constant 0 : i32
    return %arg0, %arg1, %c0_i32 : i32, i32, i32
  }
  func.func @transform_1(%arg0: i32, %arg1: i32) -> (i32, i32) {
    %c0_i32 = arith.constant 0 : i32
    %c0_i32_0 = arith.constant 0 : i32
    %c0_i32_1 = arith.constant 0 : i32
    return %c0_i32, %c0_i32_0 : i32, i32
  }
  func.func @transform_2(%arg0: i32, %arg1: i32) -> (i32, i32) {
    %c0_i32 = arith.constant 0 : i32
    %c0_i32_0 = arith.constant 0 : i32
    %c0_i32_1 = arith.constant 0 : i32
    return %c0_i32, %c0_i32_0 : i32, i32
  }
  func.func @transform_3(%arg0: i32, %arg1: i32) -> (i32, i32, i32, i32) {
    %c0_i32 = arith.constant 0 : i32
    %c0_i32_0 = arith.constant 0 : i32
    %c0_i32_1 = arith.constant 0 : i32
    return %arg0, %c0_i32, %arg1, %c0_i32_0 : i32, i32, i32, i32
  }
  func.func @transform_4(%arg0: i32, %arg1: i32) -> (i32, i32, i32, i32) {
    %c0_i32 = arith.constant 0 : i32
    %c0_i32_0 = arith.constant 0 : i32
    %c0_i32_1 = arith.constant 0 : i32
    return %arg0, %c0_i32, %arg1, %c0_i32_0 : i32, i32, i32, i32
  }
  func.func @transform_5(%arg0: i32, %arg1: i32) -> (i32, i32, i32, i32) {
    %c0_i32 = arith.constant 0 : i32
    %c0_i32_0 = arith.constant 0 : i32
    %c0_i32_1 = arith.constant 0 : i32
    return %arg0, %c0_i32, %arg1, %c0_i32_0 : i32, i32, i32, i32
  }
}

module attributes {stable_mosaic.version = 11 : i64} {
  func.func @qkv_proj_kernel(%arg0: i32, %arg1: i32, %arg2: memref<1x8x32xf32, #tpu.memory_space<vmem>>, %arg3: memref<32x96xbf16, #tpu.memory_space<vmem>>, %arg4: memref<1x96xf32, #tpu.memory_space<vmem>>, %arg5: memref<1x4x8x8xbf16, #tpu.memory_space<vmem>>, %arg6: memref<1x4x8x8xbf16, #tpu.memory_space<vmem>>, %arg7: memref<1x4x8x8xbf16, #tpu.memory_space<vmem>>) attributes {dimension_semantics = [#tpu.dimension_semantics<parallel>, #tpu.dimension_semantics<parallel>], iteration_bounds = array<i64: 2, 1>, scalar_prefetch = 0 : i64, scratch_operands = 0 : i64, tpu.core_type = #tpu.core_type<tc>, window_params = [{transform_indices = @transform_0, window_bounds = array<i64: 1, 8, 32>}, {pipeline_mode = #tpu.pipeline_mode<synchronous>, transform_indices = @transform_1, window_bounds = array<i64: 32, 96>}, {pipeline_mode = #tpu.pipeline_mode<synchronous>, transform_indices = @transform_2, window_bounds = array<i64: 1, 96>}, {transform_indices = @transform_3, window_bounds = array<i64: 1, 4, 8, 8>}, {transform_indices = @transform_4, window_bounds = array<i64: 1, 4, 8, 8>}, {transform_indices = @transform_5, window_bounds = array<i64: 1, 4, 8, 8>}]} {
    %c0 = arith.constant 0 : index
    %c0_0 = arith.constant 0 : index
    %c0_1 = arith.constant 0 : index
    %0 = vector.load %arg2[%c0, %c0_0, %c0_1] : memref<1x8x32xf32, #tpu.memory_space<vmem>>, vector<1x8x32xf32>
    %1 = vector.shape_cast %0 : vector<1x8x32xf32> to vector<8x32xf32>
    %2 = arith.truncf %1 : vector<8x32xf32> to vector<8x32xbf16>
    %c0_2 = arith.constant 0 : index
    %c0_3 = arith.constant 0 : index
    %3 = vector.load %arg3[%c0_2, %c0_3] : memref<32x96xbf16, #tpu.memory_space<vmem>>, vector<32x96xbf16>
    %cst = arith.constant dense<0.000000e+00> : vector<8x96xf32>
    %4 = tpu.matmul %2, %3, %cst {dimension_numbers = #tpu.dot_dimension_numbers<[1], [0], [0], [1], [0, 0, 1, 1], [], []>} : vector<8x32xbf16>, vector<32x96xbf16>, vector<8x96xf32> -> vector<8x96xf32>
    %c0_4 = arith.constant 0 : index
    %c0_5 = arith.constant 0 : index
    %5 = vector.load %arg4[%c0_4, %c0_5] : memref<1x96xf32, #tpu.memory_space<vmem>>, vector<1x96xf32>
    %6 = vector.broadcast %5 : vector<1x96xf32> to vector<8x96xf32>
    %7 = arith.addf %4, %6 : vector<8x96xf32>
    %8 = arith.truncf %7 : vector<8x96xf32> to vector<8x96xbf16>
    %9 = vector.extract_strided_slice %8 {offsets = [0, 0], sizes = [8, 8], strides = [1, 1]} : vector<8x96xbf16> to vector<8x8xbf16>
    %c0_6 = arith.constant 0 : index
    %c0_7 = arith.constant 0 : index
    %c0_8 = arith.constant 0 : index
    %c0_9 = arith.constant 0 : index
    %10 = vector.load %arg5[%c0_6, %c0_7, %c0_8, %c0_9] : memref<1x4x8x8xbf16, #tpu.memory_space<vmem>>, vector<1x1x8x8xbf16>
    %11 = vector.shape_cast %10 : vector<1x1x8x8xbf16> to vector<8x8xbf16>
    %12 = vector.shape_cast %9 : vector<8x8xbf16> to vector<1x1x8x8xbf16>
    tpu.vector_store %arg5[%c0_6, %c0_7, %c0_8, %c0_9], %12 {strides = array<i32>} : memref<1x4x8x8xbf16, #tpu.memory_space<vmem>>, vector<1x1x8x8xbf16>,
    %13 = vector.extract_strided_slice %8 {offsets = [0, 32], sizes = [8, 8], strides = [1, 1]} : vector<8x96xbf16> to vector<8x8xbf16>
    %c0_10 = arith.constant 0 : index
    %c0_11 = arith.constant 0 : index
    %c0_12 = arith.constant 0 : index
    %c0_13 = arith.constant 0 : index
    %14 = vector.load %arg6[%c0_10, %c0_11, %c0_12, %c0_13] : memref<1x4x8x8xbf16, #tpu.memory_space<vmem>>, vector<1x1x8x8xbf16>
    %15 = vector.shape_cast %14 : vector<1x1x8x8xbf16> to vector<8x8xbf16>
    %16 = vector.shape_cast %13 : vector<8x8xbf16> to vector<1x1x8x8xbf16>
    tpu.vector_store %arg6[%c0_10, %c0_11, %c0_12, %c0_13], %16 {strides = array<i32>} : memref<1x4x8x8xbf16, #tpu.memory_space<vmem>>, vector<1x1x8x8xbf16>,
    %17 = vector.extract_strided_slice %8 {offsets = [0, 64], sizes = [8, 8], strides = [1, 1]} : vector<8x96xbf16> to vector<8x8xbf16>
    %c0_14 = arith.constant 0 : index
    %c0_15 = arith.constant 0 : index
    %c0_16 = arith.constant 0 : index
    %c0_17 = arith.constant 0 : index
    %18 = vector.load %arg7[%c0_14, %c0_15, %c0_16, %c0_17] : memref<1x4x8x8xbf16, #tpu.memory_space<vmem>>, vector<1x1x8x8xbf16>
    %19 = vector.shape_cast %18 : vector<1x1x8x8xbf16> to vector<8x8xbf16>
    %20 = vector.shape_cast %17 : vector<8x8xbf16> to vector<1x1x8x8xbf16>
    tpu.vector_store %arg7[%c0_14, %c0_15, %c0_16, %c0_17], %20 {strides = array<i32>} : memref<1x4x8x8xbf16, #tpu.memory_space<vmem>>, vector<1x1x8x8xbf16>,
    %21 = vector.extract_strided_slice %8 {offsets = [0, 8], sizes = [8, 8], strides = [1, 1]} : vector<8x96xbf16> to vector<8x8xbf16>
    %c0_18 = arith.constant 0 : index
    %c1 = arith.constant 1 : index
    %c0_19 = arith.constant 0 : index
    %c0_20 = arith.constant 0 : index
    %22 = vector.load %arg5[%c0_18, %c1, %c0_19, %c0_20] : memref<1x4x8x8xbf16, #tpu.memory_space<vmem>>, vector<1x1x8x8xbf16>
    %23 = vector.shape_cast %22 : vector<1x1x8x8xbf16> to vector<8x8xbf16>
    %24 = vector.shape_cast %21 : vector<8x8xbf16> to vector<1x1x8x8xbf16>
    tpu.vector_store %arg5[%c0_18, %c1, %c0_19, %c0_20], %24 {strides = array<i32>} : memref<1x4x8x8xbf16, #tpu.memory_space<vmem>>, vector<1x1x8x8xbf16>,
    %25 = vector.extract_strided_slice %8 {offsets = [0, 40], sizes = [8, 8], strides = [1, 1]} : vector<8x96xbf16> to vector<8x8xbf16>
    %c0_21 = arith.constant 0 : index
    %c1_22 = arith.constant 1 : index
    %c0_23 = arith.constant 0 : index
    %c0_24 = arith.constant 0 : index
    %26 = vector.load %arg6[%c0_21, %c1_22, %c0_23, %c0_24] : memref<1x4x8x8xbf16, #tpu.memory_space<vmem>>, vector<1x1x8x8xbf16>
    %27 = vector.shape_cast %26 : vector<1x1x8x8xbf16> to vector<8x8xbf16>
    %28 = vector.shape_cast %25 : vector<8x8xbf16> to vector<1x1x8x8xbf16>
    tpu.vector_store %arg6[%c0_21, %c1_22, %c0_23, %c0_24], %28 {strides = array<i32>} : memref<1x4x8x8xbf16, #tpu.memory_space<vmem>>, vector<1x1x8x8xbf16>,
    %29 = vector.extract_strided_slice %8 {offsets = [0, 72], sizes = [8, 8], strides = [1, 1]} : vector<8x96xbf16> to vector<8x8xbf16>
    %c0_25 = arith.constant 0 : index
    %c1_26 = arith.constant 1 : index
    %c0_27 = arith.constant 0 : index
    %c0_28 = arith.constant 0 : index
    %30 = vector.load %arg7[%c0_25, %c1_26, %c0_27, %c0_28] : memref<1x4x8x8xbf16, #tpu.memory_space<vmem>>, vector<1x1x8x8xbf16>
    %31 = vector.shape_cast %30 : vector<1x1x8x8xbf16> to vector<8x8xbf16>
    %32 = vector.shape_cast %29 : vector<8x8xbf16> to vector<1x1x8x8xbf16>
    tpu.vector_store %arg7[%c0_25, %c1_26, %c0_27, %c0_28], %32 {strides = array<i32>} : memref<1x4x8x8xbf16, #tpu.memory_space<vmem>>, vector<1x1x8x8xbf16>,
    %33 = vector.extract_strided_slice %8 {offsets = [0, 16], sizes = [8, 8], strides = [1, 1]} : vector<8x96xbf16> to vector<8x8xbf16>
    %c0_29 = arith.constant 0 : index
    %c2 = arith.constant 2 : index
    %c0_30 = arith.constant 0 : index
    %c0_31 = arith.constant 0 : index
    %34 = vector.load %arg5[%c0_29, %c2, %c0_30, %c0_31] : memref<1x4x8x8xbf16, #tpu.memory_space<vmem>>, vector<1x1x8x8xbf16>
    %35 = vector.shape_cast %34 : vector<1x1x8x8xbf16> to vector<8x8xbf16>
    %36 = vector.shape_cast %33 : vector<8x8xbf16> to vector<1x1x8x8xbf16>
    tpu.vector_store %arg5[%c0_29, %c2, %c0_30, %c0_31], %36 {strides = array<i32>} : memref<1x4x8x8xbf16, #tpu.memory_space<vmem>>, vector<1x1x8x8xbf16>,
    %37 = vector.extract_strided_slice %8 {offsets = [0, 48], sizes = [8, 8], strides = [1, 1]} : vector<8x96xbf16> to vector<8x8xbf16>
    %c0_32 = arith.constant 0 : index
    %c2_33 = arith.constant 2 : index
    %c0_34 = arith.constant 0 : index
    %c0_35 = arith.constant 0 : index
    %38 = vector.load %arg6[%c0_32, %c2_33, %c0_34, %c0_35] : memref<1x4x8x8xbf16, #tpu.memory_space<vmem>>, vector<1x1x8x8xbf16>
    %39 = vector.shape_cast %38 : vector<1x1x8x8xbf16> to vector<8x8xbf16>
    %40 = vector.shape_cast %37 : vector<8x8xbf16> to vector<1x1x8x8xbf16>
    tpu.vector_store %arg6[%c0_32, %c2_33, %c0_34, %c0_35], %40 {strides = array<i32>} : memref<1x4x8x8xbf16, #tpu.memory_space<vmem>>, vector<1x1x8x8xbf16>,
    %41 = vector.extract_strided_slice %8 {offsets = [0, 80], sizes = [8, 8], strides = [1, 1]} : vector<8x96xbf16> to vector<8x8xbf16>
    %c0_36 = arith.constant 0 : index
    %c2_37 = arith.constant 2 : index
    %c0_38 = arith.constant 0 : index
    %c0_39 = arith.constant 0 : index
    %42 = vector.load %arg7[%c0_36, %c2_37, %c0_38, %c0_39] : memref<1x4x8x8xbf16, #tpu.memory_space<vmem>>, vector<1x1x8x8xbf16>
    %43 = vector.shape_cast %42 : vector<1x1x8x8xbf16> to vector<8x8xbf16>
    %44 = vector.shape_cast %41 : vector<8x8xbf16> to vector<1x1x8x8xbf16>
    tpu.vector_store %arg7[%c0_36, %c2_37, %c0_38, %c0_39], %44 {strides = array<i32>} : memref<1x4x8x8xbf16, #tpu.memory_space<vmem>>, vector<1x1x8x8xbf16>,
    %45 = vector.extract_strided_slice %8 {offsets = [0, 24], sizes = [8, 8], strides = [1, 1]} : vector<8x96xbf16> to vector<8x8xbf16>
    %c0_40 = arith.constant 0 : index
    %c3 = arith.constant 3 : index
    %c0_41 = arith.constant 0 : index
    %c0_42 = arith.constant 0 : index
    %46 = vector.load %arg5[%c0_40, %c3, %c0_41, %c0_42] : memref<1x4x8x8xbf16, #tpu.memory_space<vmem>>, vector<1x1x8x8xbf16>
    %47 = vector.shape_cast %46 : vector<1x1x8x8xbf16> to vector<8x8xbf16>
    %48 = vector.shape_cast %45 : vector<8x8xbf16> to vector<1x1x8x8xbf16>
    tpu.vector_store %arg5[%c0_40, %c3, %c0_41, %c0_42], %48 {strides = array<i32>} : memref<1x4x8x8xbf16, #tpu.memory_space<vmem>>, vector<1x1x8x8xbf16>,
    %49 = vector.extract_strided_slice %8 {offsets = [0, 56], sizes = [8, 8], strides = [1, 1]} : vector<8x96xbf16> to vector<8x8xbf16>
    %c0_43 = arith.constant 0 : index
    %c3_44 = arith.constant 3 : index
    %c0_45 = arith.constant 0 : index
    %c0_46 = arith.constant 0 : index
    %50 = vector.load %arg6[%c0_43, %c3_44, %c0_45, %c0_46] : memref<1x4x8x8xbf16, #tpu.memory_space<vmem>>, vector<1x1x8x8xbf16>
    %51 = vector.shape_cast %50 : vector<1x1x8x8xbf16> to vector<8x8xbf16>
    %52 = vector.shape_cast %49 : vector<8x8xbf16> to vector<1x1x8x8xbf16>
    tpu.vector_store %arg6[%c0_43, %c3_44, %c0_45, %c0_46], %52 {strides = array<i32>} : memref<1x4x8x8xbf16, #tpu.memory_space<vmem>>, vector<1x1x8x8xbf16>,
    %53 = vector.extract_strided_slice %8 {offsets = [0, 88], sizes = [8, 8], strides = [1, 1]} : vector<8x96xbf16> to vector<8x8xbf16>
    %c0_47 = arith.constant 0 : index
    %c3_48 = arith.constant 3 : index
    %c0_49 = arith.constant 0 : index
    %c0_50 = arith.constant 0 : index
    %54 = vector.load %arg7[%c0_47, %c3_48, %c0_49, %c0_50] : memref<1x4x8x8xbf16, #tpu.memory_space<vmem>>, vector<1x1x8x8xbf16>
    %55 = vector.shape_cast %54 : vector<1x1x8x8xbf16> to vector<8x8xbf16>
    %56 = vector.shape_cast %53 : vector<8x8xbf16> to vector<1x1x8x8xbf16>
    tpu.vector_store %arg7[%c0_47, %c3_48, %c0_49, %c0_50], %56 {strides = array<i32>} : memref<1x4x8x8xbf16, #tpu.memory_space<vmem>>, vector<1x1x8x8xbf16>,
    return
  }
  func.func @transform_0(%arg0: i32, %arg1: i32) -> (i32, i32, i32) {
    %c0_i32 = arith.constant 0 : i32
    %c0_i32_0 = arith.constant 0 : i32
    return %arg0, %arg1, %c0_i32 : i32, i32, i32
  }
  func.func @transform_1(%arg0: i32, %arg1: i32) -> (i32, i32) {
    %c0_i32 = arith.constant 0 : i32
    %c0_i32_0 = arith.constant 0 : i32
    %c0_i32_1 = arith.constant 0 : i32
    return %c0_i32, %c0_i32_0 : i32, i32
  }
  func.func @transform_2(%arg0: i32, %arg1: i32) -> (i32, i32) {
    %c0_i32 = arith.constant 0 : i32
    %c0_i32_0 = arith.constant 0 : i32
    %c0_i32_1 = arith.constant 0 : i32
    return %c0_i32, %c0_i32_0 : i32, i32
  }
  func.func @transform_3(%arg0: i32, %arg1: i32) -> (i32, i32, i32, i32) {
    %c0_i32 = arith.constant 0 : i32
    %c0_i32_0 = arith.constant 0 : i32
    %c0_i32_1 = arith.constant 0 : i32
    return %arg0, %c0_i32, %arg1, %c0_i32_0 : i32, i32, i32, i32
  }
  func.func @transform_4(%arg0: i32, %arg1: i32) -> (i32, i32, i32, i32) {
    %c0_i32 = arith.constant 0 : i32
    %c0_i32_0 = arith.constant 0 : i32
    %c0_i32_1 = arith.constant 0 : i32
    return %arg0, %c0_i32, %arg1, %c0_i32_0 : i32, i32, i32, i32
  }
  func.func @transform_5(%arg0: i32, %arg1: i32) -> (i32, i32, i32, i32) {
    %c0_i32 = arith.constant 0 : i32
    %c0_i32_0 = arith.constant 0 : i32
    %c0_i32_1 = arith.constant 0 : i32
    return %arg0, %c0_i32, %arg1, %c0_i32_0 : i32, i32, i32, i32
  }
}

</mosaic_0001>

<llo_original>
// kernel: tpu_custom_call.1
$region0: #{tpu_custom_call.1}
  #allocation0 [shape = 'u32[]', space=smem, size = 0x4, offset = 0x4, fixed_abs, tag = 'smem constant byte address 0x4 - core index']
  #allocation1 [shape = 'u32[144,128]{1,0:T(1,128)}', space=vmem, size = 0x12000, scoped, tag = 'internal scratch']
  %s0 = inlined_call_operand.hbm [shape: f32[2,8,32], index: 0, kind: input, shape index: {}]
  %s1 = inlined_call_operand.hbm [shape: bf16[32,96], index: 1, kind: input, shape index: {}]
  %s2 = inlined_call_operand.hbm [shape: f32[1,96], index: 2, kind: input, shape index: {}]
  %s3 = inlined_call_operand.hbm [shape: bf16[2,4,8,8], index: 3, kind: output, shape index: {0}]
  %s4 = inlined_call_operand.hbm [shape: bf16[2,4,8,8], index: 4, kind: output, shape index: {1}]
  %s5 = inlined_call_operand.hbm [shape: bf16[2,4,8,8], index: 5, kind: output, shape index: {2}]
  %6 = xla_tuple %s3, %s4, %s5
  %s7 = sld [smem:[#allocation0]]
  $region73: #{tpu_custom_call.1} parent=0
    _
  %s9 = ssub.s32 1, %s7
  %s10 = scalar_select 0, %s9, %s7
  $region1: #{tpu_custom_call.1} parent=0
    #allocation2 [shape = 'u8[8192]{0}', space=vmem, size = 0x2000, scoped, tag = 'input window, operand 0']
    #allocation3 [shape = 's32[2]{0}', space=sflag, size = 0x8, scoped, tag = 'scoped memory for tpu_custom_call.1']
    #allocation4 [shape = 's32[2]{0}', space=sflag, size = 0x8, scoped, tag = 'scoped memory for tpu_custom_call.1']
    #allocation5 [shape = 'u8[8192]{0}', space=vmem, size = 0x2000, scoped, tag = 'input window, operand 1, single buffered']
    #allocation6 [shape = 's32[1]{0}', space=sflag, size = 0x4, scoped, tag = 'scoped memory for tpu_custom_call.1']
    #allocation7 [shape = 'u8[512]{0}', space=vmem, size = 0x400, scoped, tag = 'input window, operand 2, single buffered']
    #allocation8 [shape = 'u8[16384]{0}', space=vmem, size = 0x4000, scoped, tag = 'output window, operand 0']
    #allocation9 [shape = 'u8[16384]{0}', space=vmem, size = 0x4000, scoped, tag = 'output window, operand 1']
    #allocation10 [shape = 's32[2]{0}', space=sflag, size = 0x8, scoped, tag = 'scoped memory for tpu_custom_call.1']
    #allocation11 [shape = 'u8[16384]{0}', space=vmem, size = 0x4000, scoped, tag = 'output window, operand 2']
    %11 = vsyncpa [#allocation3], 0
    %s12 = scalar_lea.sflag [#allocation3], 1
    %13 = vsyncpa %s12, 0
    %14 = vsyncpa [#allocation6], 0
    %15 = vsyncpa [#allocation4], 0
    %s16 = scalar_lea.sflag [#allocation4], 1
    %17 = vsyncpa %s16, 0
    %18 = vsyncpa [#allocation10], 0
    %s19 = scalar_lea.sflag [#allocation10], 1
    %20 = vsyncpa %s19, 0
    loop: start=0, step=1, limit=4
    $region2: #{tpu_custom_call.1} parent=1 // loop_pre_header
      _
    $region3: #{tpu_custom_call.1} parent=1 // loop_header
      %s22 = sphi 0, %s26
      %p23 = scmp.ge.s32.totalorder %s22, 4
      %s29 = sphi 0, %s41
      %s30 = sphi 0, %s37
      %s31 = sphi 0, %s29
      %s32 = sphi 0, %s30
      %s33 = sphi 0, %s31
      %s34 = sphi 0, %s32
      %s46 = sphi 0, %s48
      %s49 = sphi 0, %s46
      %s50 = sphi 0, %s49
      %s66 = sphi 0, %s50
      %s70 = sphi 0, %s70
      %s72 = sphi 0, %s70
      %s73 = sphi 0, %s72
      %s87 = sphi 0, %s73
      %s91 = sphi 0, %s91
      %s93 = sphi 0, %s91
      %s94 = sphi 0, %s93
      %s108 = sphi 0, %s94
      %s116 = sphi 0, %s118
      %s119 = sphi 0, %s116
      %s120 = sphi 0, %s119
      %s136 = sphi 0, %s120
      %s144 = sphi 0, %s146
      %s147 = sphi 0, %s144
      %s148 = sphi 0, %s147
      %s164 = sphi 0, %s148
      %s172 = sphi 0, %s174
      %s175 = sphi 0, %s172
      %s176 = sphi 0, %s175
      %s192 = sphi 0, %s176
    $region4: #{tpu_custom_call.1} parent=1 // loop_header_branch
      %25 = sbr.rel (%p23) target = $region8
    $region5: #{tpu_custom_call.1} parent=1 // loop_body
      %s27 = ssub.s32 %s22, 1
      %s28 = ssub.s32 %s22, 2
      %s35 = sadd.s32 1, %s30
      %p36 = scmp.ge.s32.totalorder %s35, 1
      %s37 = scalar_select %p36, 0, %s35
      %s38 = sadd.s32 1, %s29
      %s39 = scalar_select %p36, %s38, %s29
      %p40 = scmp.ge.s32.totalorder %s39, 2
      %s41 = scalar_select %p40, 0, %s39
      %s42 = ssub.s32 %s29, %s41
      %s43 = ssub.s32 %s30, %s37
      %s44 = sor.u32 %s42, %s43
      %p45 = scmp.eq.s32.totalorder %s44, 0
      %s47 = sadd.s32 %s46, 1
      %s48 = scalar_select %p45, %s46, %s47
      %p51 = pneg %p45
      %p52 = scmp.eq.s32.totalorder %s22, 1
      %p53 = por %p51, %p52
      %p54 = scmp.ne.s32.totalorder %s46, %s49
      %p55 = scmp.eq.s32.totalorder %s22, 0
      %p56 = por %p54, %p55
      %p57 = scmp.ne.s32.totalorder %s46, %s49
      %p58 = scmp.eq.s32.totalorder %s27, 1
      %p59 = por %p57, %p58
      %p60 = scmp.ne.s32.totalorder %s49, %s50
      %p61 = scmp.eq.s32.totalorder %s27, 0
      %p62 = por %p60, %p61
      %p63 = scmp.ne.s32.totalorder %s49, %s50
      %p64 = scmp.eq.s32.totalorder %s28, 1
      %p65 = por %p63, %p64
      %p67 = scmp.ne.s32.totalorder %s50, %s66
      %p68 = scmp.eq.s32.totalorder %s28, 0
      %p69 = por %p67, %p68
      %s71 = sadd.s32 %s70, 1
      %p74 = scmp.eq.s32.totalorder %s22, 1
      %p75 = scmp.ne.s32.totalorder %s70, %s72
      %p76 = scmp.eq.s32.totalorder %s22, 0
      %p77 = por %p75, %p76
      %p78 = scmp.ne.s32.totalorder %s70, %s72
      %p79 = scmp.eq.s32.totalorder %s27, 1
      %p80 = por %p78, %p79
      %p81 = scmp.ne.s32.totalorder %s72, %s73
      %p82 = scmp.eq.s32.totalorder %s27, 0
      %p83 = por %p81, %p82
      %p84 = scmp.ne.s32.totalorder %s72, %s73
      %p85 = scmp.eq.s32.totalorder %s28, 1
      %p86 = por %p84, %p85
      %p88 = scmp.ne.s32.totalorder %s73, %s87
      %p89 = scmp.eq.s32.totalorder %s28, 0
      %p90 = por %p88, %p89
      %s92 = sadd.s32 %s91, 1
      %p95 = scmp.eq.s32.totalorder %s22, 1
      %p96 = scmp.ne.s32.totalorder %s91, %s93
      %p97 = scmp.eq.s32.totalorder %s22, 0
      %p98 = por %p96, %p97
      %p99 = scmp.ne.s32.totalorder %s91, %s93
      %p100 = scmp.eq.s32.totalorder %s27, 1
      %p101 = por %p99, %p100
      %p102 = scmp.ne.s32.totalorder %s93, %s94
      %p103 = scmp.eq.s32.totalorder %s27, 0
      %p104 = por %p102, %p103
      %p105 = scmp.ne.s32.totalorder %s93, %s94
      %p106 = scmp.eq.s32.totalorder %s28, 1
      %p107 = por %p105, %p106
      %p109 = scmp.ne.s32.totalorder %s94, %s108
      %p110 = scmp.eq.s32.totalorder %s28, 0
      %p111 = por %p109, %p110
      %s112 = ssub.s32 %s29, %s41
      %s113 = ssub.s32 %s30, %s37
      %s114 = sor.u32 %s112, %s113
      %p115 = scmp.eq.s32.totalorder %s114, 0
      %s117 = sadd.s32 %s116, 1
      %s118 = scalar_select %p115, %s116, %s117
      %p121 = pneg %p115
      %p122 = scmp.eq.s32.totalorder %s22, 1
      %p123 = por %p121, %p122
      %p124 = scmp.ne.s32.totalorder %s116, %s119
      %p125 = scmp.eq.s32.totalorder %s22, 0
      %p126 = por %p124, %p125
      %p127 = scmp.ne.s32.totalorder %s116, %s119
      %p128 = scmp.eq.s32.totalorder %s27, 1
      %p129 = por %p127, %p128
      %p130 = scmp.ne.s32.totalorder %s119, %s120
      %p131 = scmp.eq.s32.totalorder %s27, 0
      %p132 = por %p130, %p131
      %p133 = scmp.ne.s32.totalorder %s119, %s120
      %p134 = scmp.eq.s32.totalorder %s28, 1
      %p135 = por %p133, %p134
      %p137 = scmp.ne.s32.totalorder %s120, %s136
      %p138 = scmp.eq.s32.totalorder %s28, 0
      %p139 = por %p137, %p138
      %s140 = ssub.s32 %s29, %s41
      %s141 = ssub.s32 %s30, %s37
      %s142 = sor.u32 %s140, %s141
      %p143 = scmp.eq.s32.totalorder %s142, 0
      %s145 = sadd.s32 %s144, 1
      %s146 = scalar_select %p143, %s144, %s145
      %p149 = pneg %p143
      %p150 = scmp.eq.s32.totalorder %s22, 1
      %p151 = por %p149, %p150
      %p152 = scmp.ne.s32.totalorder %s144, %s147
      %p153 = scmp.eq.s32.totalorder %s22, 0
      %p154 = por %p152, %p153
      %p155 = scmp.ne.s32.totalorder %s144, %s147
      %p156 = scmp.eq.s32.totalorder %s27, 1
      %p157 = por %p155, %p156
      %p158 = scmp.ne.s32.totalorder %s147, %s148
      %p159 = scmp.eq.s32.totalorder %s27, 0
      %p160 = por %p158, %p159
      %p161 = scmp.ne.s32.totalorder %s147, %s148
      %p162 = scmp.eq.s32.totalorder %s28, 1
      %p163 = por %p161, %p162
      %p165 = scmp.ne.s32.totalorder %s148, %s164
      %p166 = scmp.eq.s32.totalorder %s28, 0
      %p167 = por %p165, %p166
      %s168 = ssub.s32 %s29, %s41
      %s169 = ssub.s32 %s30, %s37
      %s170 = sor.u32 %s168, %s169
      %p171 = scmp.eq.s32.totalorder %s170, 0
      %s173 = sadd.s32 %s172, 1
      %s174 = scalar_select %p171, %s172, %s173
      %p177 = pneg %p171
      %p178 = scmp.eq.s32.totalorder %s22, 1
      %p179 = por %p177, %p178
      %p180 = scmp.ne.s32.totalorder %s172, %s175
      %p181 = scmp.eq.s32.totalorder %s22, 0
      %p182 = por %p180, %p181
      %p183 = scmp.ne.s32.totalorder %s172, %s175
      %p184 = scmp.eq.s32.totalorder %s27, 1
      %p185 = por %p183, %p184
      %p186 = scmp.ne.s32.totalorder %s175, %s176
      %p187 = scmp.eq.s32.totalorder %s27, 0
      %p188 = por %p186, %p187
      %p189 = scmp.ne.s32.totalorder %s175, %s176
      %p190 = scmp.eq.s32.totalorder %s28, 1
      %p191 = por %p189, %p190
      %p193 = scmp.ne.s32.totalorder %s176, %s192
      %p194 = scmp.eq.s32.totalorder %s28, 0
      %p195 = por %p193, %p194
      %p196 = scmp.le.s32.totalorder 1, %s22
      %p197 = scmp.lt.s32.totalorder %s22, 3
      %p198 = pnand %p196, %p197
      %p199 = pneg %p198
      // Predicated region
      $region9: #{tpu_custom_call.1} parent=5 // pred_check
        _
      $region10: #{tpu_custom_call.1} parent=5 // pred_check_branch
        %201 = sbr.rel (%p198) target = $region12
      $region11: #{tpu_custom_call.1} parent=5 // pred_region
        %s202 = ssub.s32 %s22, 1
        // Predicated region
        $region13: #{tpu_custom_call.1} parent=11 // pred_check
          %p203 = pneg %p83
        $region14: #{tpu_custom_call.1} parent=11 // pred_check_branch
          %205 = sbr.rel (%p203) target = $region16
        $region15: #{tpu_custom_call.1} parent=11 // pred_region
          %s207 = ssub.s32 256, 256
          %208 = vsyncadd [#allocation6], %s207
          %s209 = sshll.u32 [#allocation5], 4
          %s210 = int_to_ptr.vmem [resolvable:$true] %s209
          %215 = dma.hbm_to_vmem [thread:$0]  %s1, 256, %s210, [#allocation6], 64, 64, 4
        $region16: #{tpu_custom_call.1} parent=11 // pred_fallthru
          _
        // Predicated region
        $region17: #{tpu_custom_call.1} parent=11 // pred_check
          %p216 = pneg %p104
        $region18: #{tpu_custom_call.1} parent=11 // pred_check_branch
          %218 = sbr.rel (%p216) target = $region20
        $region19: #{tpu_custom_call.1} parent=11 // pred_region
          %s220 = ssub.s32 16, 16
          %221 = vsyncadd [#allocation6], %s220
          %s223 = sshll.u32 [#allocation7], 4
          %s224 = int_to_ptr.vmem [resolvable:$true] %s223
          %226 = dma.hbm_to_vmem [thread:$0]  %s2, 16, %s224, [#allocation6]
        $region20: #{tpu_custom_call.1} parent=11 // pred_fallthru
          _
      $region12: #{tpu_custom_call.1} parent=5 // pred_fallthru
        _
      %p227 = scmp.lt.s32.totalorder %s22, 2
      // Predicated region
      $region21: #{tpu_custom_call.1} parent=5 // pred_check
        %p228 = pneg %p227
      $region22: #{tpu_custom_call.1} parent=5 // pred_check_branch
        %230 = sbr.rel (%p228) target = $region24
      $region23: #{tpu_custom_call.1} parent=5 // pred_region
        // Predicated region
        $region25: #{tpu_custom_call.1} parent=23 // pred_check
          %p231 = pneg %p56
        $region26: #{tpu_custom_call.1} parent=23 // pred_check_branch
          %233 = sbr.rel (%p231) target = $region28
        $region27: #{tpu_custom_call.1} parent=23 // pred_region
          %s234 = sand.u32 %s46, 1
          %s235 = scalar_lea.sflag [#allocation3], %s234
          %s236 = sand.u32 %s46, 1
          %s237 = smul.addr %s236, 8
          %s238 = scalar_lea.vmem [#allocation2], %s237
          %s240 = ssub.s32 128, 128
          %241 = vsyncadd %s235, %s240
          %s242 = sadd.s32 %s30, %s29
          %s243 = smul.addr %s242, 128
          %s244 = scalar_lea.hbm %s0, %s243
          %s246 = sshll.u32 %s238, 4
          %s247 = int_to_ptr.vmem [resolvable:$true] %s246
          %249 = dma.hbm_to_vmem [thread:$0]  %s244, 128, %s247, %s235
        $region28: #{tpu_custom_call.1} parent=23 // pred_fallthru
          _
      $region24: #{tpu_custom_call.1} parent=5 // pred_fallthru
        _
      %p250 = scmp.le.s32.totalorder 1, %s22
      %p251 = scmp.lt.s32.totalorder %s22, 3
      %p252 = pnand %p250, %p251
      %p253 = pneg %p252
      // Predicated region
      $region29: #{tpu_custom_call.1} parent=5 // pred_check
        _
      $region30: #{tpu_custom_call.1} parent=5 // pred_check_branch
        %255 = sbr.rel (%p252) target = $region32
      $region31: #{tpu_custom_call.1} parent=5 // pred_region
        %s256 = ssub.s32 %s22, 1
        %s257 = sand.u32 %s49, 1
        %s258 = scalar_lea.sflag [#allocation3], %s257
        %s259 = sand.u32 %s49, 1
        %s260 = smul.addr %s259, 8
        %s261 = scalar_lea.vmem [#allocation2], %s260
        // Predicated region
        $region33: #{tpu_custom_call.1} parent=31 // pred_check
          %p262 = pneg %p62
        $region34: #{tpu_custom_call.1} parent=31 // pred_check_branch
          %264 = sbr.rel (%p262) target = $region36
        $region35: #{tpu_custom_call.1} parent=31 // pred_region
          %265 = dma.done %s258, 128
        $region36: #{tpu_custom_call.1} parent=31 // pred_fallthru
          _
        // Predicated region
        $region37: #{tpu_custom_call.1} parent=31 // pred_check
          %p266 = pneg %p83
        $region38: #{tpu_custom_call.1} parent=31 // pred_check_branch
          %268 = sbr.rel (%p266) target = $region40
        $region39: #{tpu_custom_call.1} parent=31 // pred_region
          %269 = dma.done [#allocation6], 256
        $region40: #{tpu_custom_call.1} parent=31 // pred_fallthru
          _
        // Predicated region
        $region41: #{tpu_custom_call.1} parent=31 // pred_check
          %p270 = pneg %p104
        $region42: #{tpu_custom_call.1} parent=31 // pred_check_branch
          %272 = sbr.rel (%p270) target = $region44
        $region43: #{tpu_custom_call.1} parent=31 // pred_region
          %273 = dma.done [#allocation6], 16
        $region44: #{tpu_custom_call.1} parent=31 // pred_fallthru
          _
        %s274 = sand.u32 %s49, 1
        %s275 = scalar_lea.sflag [#allocation3], %s274
        %s276 = sand.u32 %s49, 1
        %s277 = smul.addr %s276, 8
        %s278 = scalar_lea.vmem [#allocation2], %s277
        %p279 = pneg %p62
        %p280 = pneg %p59
        %p281 = pneg %p83
        %p282 = pneg %p80
        %p283 = pneg %p104
        %p284 = pneg %p101
        %p285 = pneg %p132
        %p286 = pneg %p129
        %s287 = sand.u32 %s119, 1
        %s288 = scalar_lea.sflag [#allocation4], %s287
        %s289 = sand.u32 %s119, 1
        %s290 = smul.addr %s289, 16
        %s291 = scalar_lea.vmem [#allocation8], %s290
        %p292 = pneg %p160
        %p293 = pneg %p157
        %s294 = sand.u32 %s27, 1
        %s295 = scalar_lea.sflag [#allocation10], %s294
        %s296 = sand.u32 %s147, 1
        %s297 = smul.addr %s296, 16
        %s298 = scalar_lea.vmem [#allocation9], %s297
        %p299 = pneg %p188
        %p300 = pneg %p185
        %s301 = sand.u32 %s27, 1
        %s302 = scalar_lea.sflag [#allocation10], %s301
        %s303 = sand.u32 %s175, 1
        %s304 = smul.addr %s303, 16
        %s305 = scalar_lea.vmem [#allocation11], %s304
        %v307 = vld [vmem:[%s261] sm:$0xff]
        %v308 = vpack.c.bf16 %v307, %v307
        %v309 = vld [vmem:[#allocation5] sm:$0xf]
        %v310 = vld [vmem:[#allocation5 + $0x4] sm:$0xf]
        %v311 = vld [vmem:[#allocation5 + $0x8] sm:$0xf]
        %v312 = vld [vmem:[#allocation5 + $0xc] sm:$0xf]
        %v313 = vld [vmem:[#allocation7] sm:$0x1]
        %v315 = vlaneseq
        %v316 = vshrl.u32 %v315, 7
        %v317 = vsub.s32 0, %v316
        %v318 = vrot.slane %v313, %v317
        %v324 = vunpack.c.l.b16 %v309
        %v325 = vunpack.c.l.b16 %v310
        %v326 = vunpack.c.l.b16 %v311
        %v327 = vunpack.c.l.b16 %v312
        %v328 = vpack.c.b16 %v325, %v324
        %v329 = vpack.c.b16 %v327, %v326
        %vm332 = vcmask 261120
        %v334 = vsel %vm332, %v308, 0
        %336 = vmatprep.subr.bf16.mxu0 0
        %337 = vmatpush1.bf16.msra.mxu0 %v328
        %338 = vmatprep.subr.bf16.mxu0 0
        %339 = vmatpush1.bf16.msra.mxu0 %v329
        %340 = vmatprep.subr.bf16.mxu0 0
        %341 = vmatpush1.bf16.msra.mxu0 0
        %342 = vmatprep.subr.bf16.mxu0 0
        %343 = vmatpush1.bf16.msra.mxu0 0
        %344 = vmatprep.subr.bf16.mxu0 0
        %345 = vmatpush1.bf16.msra.mxu0 0
        %346 = vmatprep.subr.bf16.mxu0 0
        %347 = vmatpush1.bf16.msra.mxu0 0
        %348 = vmatprep.subr.bf16.mxu0 0
        %349 = vmatpush1.bf16.msra.mxu0 0
        %350 = vmatprep.subr.bf16.mxu0 0
        %351 = vmatpush1.bf16.msra.mxu0 0
        %352 = vmatprep.subr.bf16.mxu0 0
        %353 = vmatpush1.bf16.msra.mxu0 0
        %354 = vmatprep.subr.bf16.mxu0 0
        %355 = vmatpush1.bf16.msra.mxu0 0
        %356 = vmatprep.subr.bf16.mxu0 0
        %357 = vmatpush1.bf16.msra.mxu0 0
        %358 = vmatprep.subr.bf16.mxu0 0
        %359 = vmatpush1.bf16.msra.mxu0 0
        %360 = vmatprep.subr.bf16.mxu0 0
        %361 = vmatpush1.bf16.msra.mxu0 0
        %362 = vmatprep.subr.bf16.mxu0 0
        %363 = vmatpush1.bf16.msra.mxu0 0
        %364 = vmatprep.subr.bf16.mxu0 0
        %365 = vmatpush1.bf16.msra.mxu0 0
        %366 = vmatprep.subr.bf16.mxu0 0
        %367 = vmatpush1.bf16.msra.mxu0 0
        %368 = vmatprep.mubr.bf16.mxu0 0
        %369 = vmatmul.mubr.bf16.gmra.mrb[0].mxu0 %v334
        %v370 = vpop.f32.mrb[0].mxu0
        %v371 = vadd.f32 %v318, %v370
        %v372 = vpop.f32.mrb[0].mxu0
        %v373 = vpop.f32.mrb[0].mxu0
        %v374 = vpop.f32.mrb[0].mxu0
        %375 = vdwg.mxu0
        %v376 = vpack.c.bf16 %v371, %v371
        %vm377 = vcmask 60416
        %378 = vst.msk [vmem:[%s291] sm:$0xf] %vm377, %v376
        %v380 = vunpack.c.l.b16 %v376
        %v381 = vpack.c.b16 %v380, %v380
        %382 = vrot.lane.b32.xlu0 %v381, 96
        %v383 = vpop.permute.xlu0 %382
        %385 = vst.msk [vmem:[%s298] sm:$0xf] %vm377, %v383
        %386 = vrot.lane.b32.xlu0 %v381, 64
        %v387 = vpop.permute.xlu0 %386
        %389 = vst.msk [vmem:[%s305] sm:$0xf] %vm377, %v387
        %390 = vrot.lane.b32.xlu0 %v381, 120
        %v391 = vpop.permute.xlu0 %390
        %s393 = scalar_lea.vmem %s291, 4 [#allocation8]
        %394 = vst.msk [vmem:[%s393] sm:$0xf] %vm377, %v391
        %395 = vrot.lane.b32.xlu0 %v381, 88
        %v396 = vpop.permute.xlu0 %395
        %s398 = scalar_lea.vmem %s298, 4 [#allocation9]
        %399 = vst.msk [vmem:[%s398] sm:$0xf] %vm377, %v396
        %400 = vrot.lane.b32.xlu0 %v381, 56
        %v401 = vpop.permute.xlu0 %400
        %s403 = scalar_lea.vmem %s305, 4 [#allocation11]
        %404 = vst.msk [vmem:[%s403] sm:$0xf] %vm377, %v401
        %405 = vrot.lane.b32.xlu0 %v381, 112
        %v406 = vpop.permute.xlu0 %405
        %s408 = scalar_lea.vmem %s291, 8 [#allocation8]
        %409 = vst.msk [vmem:[%s408] sm:$0xf] %vm377, %v406
        %410 = vrot.lane.b32.xlu0 %v381, 80
        %v411 = vpop.permute.xlu0 %410
        %s413 = scalar_lea.vmem %s298, 8 [#allocation9]
        %414 = vst.msk [vmem:[%s413] sm:$0xf] %vm377, %v411
        %415 = vrot.lane.b32.xlu0 %v381, 48
        %v416 = vpop.permute.xlu0 %415
        %s418 = scalar_lea.vmem %s305, 8 [#allocation11]
        %419 = vst.msk [vmem:[%s418] sm:$0xf] %vm377, %v416
        %420 = vrot.lane.b32.xlu0 %v381, 104
        %v421 = vpop.permute.xlu0 %420
        %s423 = scalar_lea.vmem %s291, 12 [#allocation8]
        %424 = vst.msk [vmem:[%s423] sm:$0xf] %vm377, %v421
        %425 = vrot.lane.b32.xlu0 %v381, 72
        %v426 = vpop.permute.xlu0 %425
        %s428 = scalar_lea.vmem %s298, 12 [#allocation9]
        %429 = vst.msk [vmem:[%s428] sm:$0xf] %vm377, %v426
        %430 = vrot.lane.b32.xlu0 %v381, 40
        %v431 = vpop.permute.xlu0 %430
        %s433 = scalar_lea.vmem %s305, 12 [#allocation11]
        %434 = vst.msk [vmem:[%s433] sm:$0xf] %vm377, %v431
        %s435 = sand.u32 %s119, 1
        %s436 = scalar_lea.sflag [#allocation4], %s435
        %s437 = sand.u32 %s119, 1
        %s438 = smul.addr %s437, 16
        %s439 = scalar_lea.vmem [#allocation8], %s438
        %s440 = sand.u32 %s27, 1
        %s441 = scalar_lea.sflag [#allocation10], %s440
        %s442 = sand.u32 %s147, 1
        %s443 = smul.addr %s442, 16
        %s444 = scalar_lea.vmem [#allocation9], %s443
        %s445 = sand.u32 %s27, 1
        %s446 = scalar_lea.sflag [#allocation10], %s445
        %s447 = sand.u32 %s175, 1
        %s448 = smul.addr %s447, 16
        %s449 = scalar_lea.vmem [#allocation11], %s448
        // Predicated region
        $region45: #{tpu_custom_call.1} parent=31 // pred_check
          %p450 = pneg %p129
        $region46: #{tpu_custom_call.1} parent=31 // pred_check_branch
          %452 = sbr.rel (%p450) target = $region48
        $region47: #{tpu_custom_call.1} parent=31 // pred_region
          %s454 = ssub.s32 256, 256
          %455 = vsyncadd %s436, %s454
          %s456 = smul.addr %s31, 4
          %s457 = sadd.s32 %s32, %s456
          %s458 = smul.addr %s457, 64
          %s459 = scalar_lea.hbm %s3, %s458
          %s460 = sshll.u32 %s439, 4
          %s461 = int_to_ptr.vmem [resolvable:$true] %s460
          %466 = dma.vmem_to_hbm [thread:$0]  %s461, 256, %s459, %s436, 64, 64, 4
        $region48: #{tpu_custom_call.1} parent=31 // pred_fallthru
          _
        // Predicated region
        $region49: #{tpu_custom_call.1} parent=31 // pred_check
          %p467 = pneg %p157
        $region50: #{tpu_custom_call.1} parent=31 // pred_check_branch
          %469 = sbr.rel (%p467) target = $region52
        $region51: #{tpu_custom_call.1} parent=31 // pred_region
          %s471 = ssub.s32 256, 256
          %472 = vsyncadd %s441, %s471
          %s473 = smul.addr %s31, 4
          %s474 = sadd.s32 %s32, %s473
          %s475 = smul.addr %s474, 64
          %s476 = scalar_lea.hbm %s4, %s475
          %s477 = sshll.u32 %s444, 4
          %s478 = int_to_ptr.vmem [resolvable:$true] %s477
          %483 = dma.vmem_to_hbm [thread:$0]  %s478, 256, %s476, %s441, 64, 64, 4
        $region52: #{tpu_custom_call.1} parent=31 // pred_fallthru
          _
        // Predicated region
        $region53: #{tpu_custom_call.1} parent=31 // pred_check
          %p484 = pneg %p185
        $region54: #{tpu_custom_call.1} parent=31 // pred_check_branch
          %486 = sbr.rel (%p484) target = $region56
        $region55: #{tpu_custom_call.1} parent=31 // pred_region
          %s488 = ssub.s32 256, 256
          %489 = vsyncadd %s446, %s488
          %s490 = smul.addr %s31, 4
          %s491 = sadd.s32 %s32, %s490
          %s492 = smul.addr %s491, 64
          %s493 = scalar_lea.hbm %s5, %s492
          %s494 = sshll.u32 %s449, 4
          %s495 = int_to_ptr.vmem [resolvable:$true] %s494
          %500 = dma.vmem_to_hbm [thread:$0]  %s495, 256, %s493, %s446, 64, 64, 4
        $region56: #{tpu_custom_call.1} parent=31 // pred_fallthru
          _
      $region32: #{tpu_custom_call.1} parent=5 // pred_fallthru
        _
      %p501 = scmp.le.s32.totalorder 2, %s22
      // Predicated region
      $region57: #{tpu_custom_call.1} parent=5 // pred_check
        %p502 = pneg %p501
      $region58: #{tpu_custom_call.1} parent=5 // pred_check_branch
        %504 = sbr.rel (%p502) target = $region60
      $region59: #{tpu_custom_call.1} parent=5 // pred_region
        %s505 = ssub.s32 %s22, 2
        // Predicated region
        $region61: #{tpu_custom_call.1} parent=59 // pred_check
          %p506 = pneg %p135
        $region62: #{tpu_custom_call.1} parent=59 // pred_check_branch
          %508 = sbr.rel (%p506) target = $region64
        $region63: #{tpu_custom_call.1} parent=59 // pred_region
          %s509 = sand.u32 %s120, 1
          %s510 = scalar_lea.sflag [#allocation4], %s509
          %s511 = sand.u32 %s120, 1
          %s512 = smul.addr %s511, 16
          %s513 = scalar_lea.vmem [#allocation8], %s512
          %514 = dma.done %s510, 256
        $region64: #{tpu_custom_call.1} parent=59 // pred_fallthru
          _
        // Predicated region
        $region65: #{tpu_custom_call.1} parent=59 // pred_check
          %p515 = pneg %p163
        $region66: #{tpu_custom_call.1} parent=59 // pred_check_branch
          %517 = sbr.rel (%p515) target = $region68
        $region67: #{tpu_custom_call.1} parent=59 // pred_region
          %s518 = sand.u32 %s28, 1
          %s519 = scalar_lea.sflag [#allocation10], %s518
          %s520 = sand.u32 %s148, 1
          %s521 = smul.addr %s520, 16
          %s522 = scalar_lea.vmem [#allocation9], %s521
          %523 = dma.done %s519, 256
        $region68: #{tpu_custom_call.1} parent=59 // pred_fallthru
          _
        // Predicated region
        $region69: #{tpu_custom_call.1} parent=59 // pred_check
          %p524 = pneg %p191
        $region70: #{tpu_custom_call.1} parent=59 // pred_check_branch
          %526 = sbr.rel (%p524) target = $region72
        $region71: #{tpu_custom_call.1} parent=59 // pred_region
          %s527 = sand.u32 %s28, 1
          %s528 = scalar_lea.sflag [#allocation10], %s527
          %s529 = sand.u32 %s176, 1
          %s530 = smul.addr %s529, 16
          %s531 = scalar_lea.vmem [#allocation11], %s530
          %532 = dma.done %s528, 256
        $region72: #{tpu_custom_call.1} parent=59 // pred_fallthru
          _
      $region60: #{tpu_custom_call.1} parent=5 // pred_fallthru
        _
    $region6: #{tpu_custom_call.1} parent=1 // loop_footer
      %s26 = sadd.s32 1, %s22
    $region7: #{tpu_custom_call.1} parent=1 // loop_footer_branch
      %21 = sbr.rel target = $region3
    $region8: #{tpu_custom_call.1} parent=1 // loop_exit
      _
    %533 = vsyncpa [#allocation3], 1
    %s534 = scalar_lea.sflag [#allocation3], 1
    %535 = vsyncpa %s534, 1
    %536 = vsyncpa [#allocation6], 1
    %537 = vsyncpa [#allocation4], 1
    %s538 = scalar_lea.sflag [#allocation4], 1
    %539 = vsyncpa %s538, 1
    %540 = vsyncpa [#allocation10], 1
    %s541 = scalar_lea.sflag [#allocation10], 1
    %542 = vsyncpa %s541, 1

// kernel: tpu_custom_call.1
$region0: #{tpu_custom_call.1}
  #allocation0 [shape = 'u32[]', space=smem, size = 0x4, offset = 0x4, fixed_abs, tag = 'smem constant byte address 0x4 - core index']
  #allocation1 [shape = 'u32[144,128]{1,0:T(1,128)}', space=vmem, size = 0x12000, scoped, tag = 'internal scratch']
  %s0 = inlined_call_operand.hbm [shape: f32[2,8,32], index: 0, kind: input, shape index: {}]
  %s1 = inlined_call_operand.hbm [shape: bf16[32,96], index: 1, kind: input, shape index: {}]
  %s2 = inlined_call_operand.hbm [shape: f32[1,96], index: 2, kind: input, shape index: {}]
  %s3 = inlined_call_operand.hbm [shape: bf16[2,4,8,8], index: 3, kind: output, shape index: {0}]
  %s4 = inlined_call_operand.hbm [shape: bf16[2,4,8,8], index: 4, kind: output, shape index: {1}]
  %s5 = inlined_call_operand.hbm [shape: bf16[2,4,8,8], index: 5, kind: output, shape index: {2}]
  %6 = xla_tuple %s3, %s4, %s5
  %s7 = sld [smem:[#allocation0]]
  $region73: #{tpu_custom_call.1} parent=0
    _
  %s9 = ssub.s32 1, %s7
  %s10 = scalar_select 0, %s9, %s7
  $region1: #{tpu_custom_call.1} parent=0
    #allocation2 [shape = 'u8[8192]{0}', space=vmem, size = 0x2000, scoped, tag = 'input window, operand 0']
    #allocation3 [shape = 's32[2]{0}', space=sflag, size = 0x8, scoped, tag = 'scoped memory for tpu_custom_call.1']
    #allocation4 [shape = 's32[2]{0}', space=sflag, size = 0x8, scoped, tag = 'scoped memory for tpu_custom_call.1']
    #allocation5 [shape = 'u8[8192]{0}', space=vmem, size = 0x2000, scoped, tag = 'input window, operand 1, single buffered']
    #allocation6 [shape = 's32[1]{0}', space=sflag, size = 0x4, scoped, tag = 'scoped memory for tpu_custom_call.1']
    #allocation7 [shape = 'u8[512]{0}', space=vmem, size = 0x400, scoped, tag = 'input window, operand 2, single buffered']
    #allocation8 [shape = 'u8[16384]{0}', space=vmem, size = 0x4000, scoped, tag = 'output window, operand 0']
    #allocation9 [shape = 'u8[16384]{0}', space=vmem, size = 0x4000, scoped, tag = 'output window, operand 1']
    #allocation10 [shape = 's32[2]{0}', space=sflag, size = 0x8, scoped, tag = 'scoped memory for tpu_custom_call.1']
    #allocation11 [shape = 'u8[16384]{0}', space=vmem, size = 0x4000, scoped, tag = 'output window, operand 2']
    %11 = vsyncpa [#allocation3], 0
    %s12 = scalar_lea.sflag [#allocation3], 1
    %13 = vsyncpa %s12, 0
    %14 = vsyncpa [#allocation6], 0
    %15 = vsyncpa [#allocation4], 0
    %s16 = scalar_lea.sflag [#allocation4], 1
    %17 = vsyncpa %s16, 0
    %18 = vsyncpa [#allocation10], 0
    %s19 = scalar_lea.sflag [#allocation10], 1
    %20 = vsyncpa %s19, 0
    loop: start=0, step=1, limit=4
    $region2: #{tpu_custom_call.1} parent=1 // loop_pre_header
      _
    $region3: #{tpu_custom_call.1} parent=1 // loop_header
      %s22 = sphi 0, %s26
      %p23 = scmp.ge.s32.totalorder %s22, 4
      %s29 = sphi 0, %s41
      %s30 = sphi 0, %s37
      %s31 = sphi 0, %s29
      %s32 = sphi 0, %s30
      %s33 = sphi 0, %s31
      %s34 = sphi 0, %s32
      %s46 = sphi 0, %s48
      %s49 = sphi 0, %s46
      %s50 = sphi 0, %s49
      %s66 = sphi 0, %s50
      %s70 = sphi 0, %s70
      %s72 = sphi 0, %s70
      %s73 = sphi 0, %s72
      %s87 = sphi 0, %s73
      %s91 = sphi 0, %s91
      %s93 = sphi 0, %s91
      %s94 = sphi 0, %s93
      %s108 = sphi 0, %s94
      %s116 = sphi 0, %s118
      %s119 = sphi 0, %s116
      %s120 = sphi 0, %s119
      %s136 = sphi 0, %s120
      %s144 = sphi 0, %s146
      %s147 = sphi 0, %s144
      %s148 = sphi 0, %s147
      %s164 = sphi 0, %s148
      %s172 = sphi 0, %s174
      %s175 = sphi 0, %s172
      %s176 = sphi 0, %s175
      %s192 = sphi 0, %s176
    $region4: #{tpu_custom_call.1} parent=1 // loop_header_branch
      %25 = sbr.rel (%p23) target = $region8
    $region5: #{tpu_custom_call.1} parent=1 // loop_body
      %s27 = ssub.s32 %s22, 1
      %s28 = ssub.s32 %s22, 2
      %s35 = sadd.s32 1, %s30
      %p36 = scmp.ge.s32.totalorder %s35, 1
      %s37 = scalar_select %p36, 0, %s35
      %s38 = sadd.s32 1, %s29
      %s39 = scalar_select %p36, %s38, %s29
      %p40 = scmp.ge.s32.totalorder %s39, 2
      %s41 = scalar_select %p40, 0, %s39
      %s42 = ssub.s32 %s29, %s41
      %s43 = ssub.s32 %s30, %s37
      %s44 = sor.u32 %s42, %s43
      %p45 = scmp.eq.s32.totalorder %s44, 0
      %s47 = sadd.s32 %s46, 1
      %s48 = scalar_select %p45, %s46, %s47
      %p51 = pneg %p45
      %p52 = scmp.eq.s32.totalorder %s22, 1
      %p53 = por %p51, %p52
      %p54 = scmp.ne.s32.totalorder %s46, %s49
      %p55 = scmp.eq.s32.totalorder %s22, 0
      %p56 = por %p54, %p55
      %p57 = scmp.ne.s32.totalorder %s46, %s49
      %p58 = scmp.eq.s32.totalorder %s27, 1
      %p59 = por %p57, %p58
      %p60 = scmp.ne.s32.totalorder %s49, %s50
      %p61 = scmp.eq.s32.totalorder %s27, 0
      %p62 = por %p60, %p61
      %p63 = scmp.ne.s32.totalorder %s49, %s50
      %p64 = scmp.eq.s32.totalorder %s28, 1
      %p65 = por %p63, %p64
      %p67 = scmp.ne.s32.totalorder %s50, %s66
      %p68 = scmp.eq.s32.totalorder %s28, 0
      %p69 = por %p67, %p68
      %s71 = sadd.s32 %s70, 1
      %p74 = scmp.eq.s32.totalorder %s22, 1
      %p75 = scmp.ne.s32.totalorder %s70, %s72
      %p76 = scmp.eq.s32.totalorder %s22, 0
      %p77 = por %p75, %p76
      %p78 = scmp.ne.s32.totalorder %s70, %s72
      %p79 = scmp.eq.s32.totalorder %s27, 1
      %p80 = por %p78, %p79
      %p81 = scmp.ne.s32.totalorder %s72, %s73
      %p82 = scmp.eq.s32.totalorder %s27, 0
      %p83 = por %p81, %p82
      %p84 = scmp.ne.s32.totalorder %s72, %s73
      %p85 = scmp.eq.s32.totalorder %s28, 1
      %p86 = por %p84, %p85
      %p88 = scmp.ne.s32.totalorder %s73, %s87
      %p89 = scmp.eq.s32.totalorder %s28, 0
      %p90 = por %p88, %p89
      %s92 = sadd.s32 %s91, 1
      %p95 = scmp.eq.s32.totalorder %s22, 1
      %p96 = scmp.ne.s32.totalorder %s91, %s93
      %p97 = scmp.eq.s32.totalorder %s22, 0
      %p98 = por %p96, %p97
      %p99 = scmp.ne.s32.totalorder %s91, %s93
      %p100 = scmp.eq.s32.totalorder %s27, 1
      %p101 = por %p99, %p100
      %p102 = scmp.ne.s32.totalorder %s93, %s94
      %p103 = scmp.eq.s32.totalorder %s27, 0
      %p104 = por %p102, %p103
      %p105 = scmp.ne.s32.totalorder %s93, %s94
      %p106 = scmp.eq.s32.totalorder %s28, 1
      %p107 = por %p105, %p106
      %p109 = scmp.ne.s32.totalorder %s94, %s108
      %p110 = scmp.eq.s32.totalorder %s28, 0
      %p111 = por %p109, %p110
      %s112 = ssub.s32 %s29, %s41
      %s113 = ssub.s32 %s30, %s37
      %s114 = sor.u32 %s112, %s113
      %p115 = scmp.eq.s32.totalorder %s114, 0
      %s117 = sadd.s32 %s116, 1
      %s118 = scalar_select %p115, %s116, %s117
      %p121 = pneg %p115
      %p122 = scmp.eq.s32.totalorder %s22, 1
      %p123 = por %p121, %p122
      %p124 = scmp.ne.s32.totalorder %s116, %s119
      %p125 = scmp.eq.s32.totalorder %s22, 0
      %p126 = por %p124, %p125
      %p127 = scmp.ne.s32.totalorder %s116, %s119
      %p128 = scmp.eq.s32.totalorder %s27, 1
      %p129 = por %p127, %p128
      %p130 = scmp.ne.s32.totalorder %s119, %s120
      %p131 = scmp.eq.s32.totalorder %s27, 0
      %p132 = por %p130, %p131
      %p133 = scmp.ne.s32.totalorder %s119, %s120
      %p134 = scmp.eq.s32.totalorder %s28, 1
      %p135 = por %p133, %p134
      %p137 = scmp.ne.s32.totalorder %s120, %s136
      %p138 = scmp.eq.s32.totalorder %s28, 0
      %p139 = por %p137, %p138
      %s140 = ssub.s32 %s29, %s41
      %s141 = ssub.s32 %s30, %s37
      %s142 = sor.u32 %s140, %s141
      %p143 = scmp.eq.s32.totalorder %s142, 0
      %s145 = sadd.s32 %s144, 1
      %s146 = scalar_select %p143, %s144, %s145
      %p149 = pneg %p143
      %p150 = scmp.eq.s32.totalorder %s22, 1
      %p151 = por %p149, %p150
      %p152 = scmp.ne.s32.totalorder %s144, %s147
      %p153 = scmp.eq.s32.totalorder %s22, 0
      %p154 = por %p152, %p153
      %p155 = scmp.ne.s32.totalorder %s144, %s147
      %p156 = scmp.eq.s32.totalorder %s27, 1
      %p157 = por %p155, %p156
      %p158 = scmp.ne.s32.totalorder %s147, %s148
      %p159 = scmp.eq.s32.totalorder %s27, 0
      %p160 = por %p158, %p159
      %p161 = scmp.ne.s32.totalorder %s147, %s148
      %p162 = scmp.eq.s32.totalorder %s28, 1
      %p163 = por %p161, %p162
      %p165 = scmp.ne.s32.totalorder %s148, %s164
      %p166 = scmp.eq.s32.totalorder %s28, 0
      %p167 = por %p165, %p166
      %s168 = ssub.s32 %s29, %s41
      %s169 = ssub.s32 %s30, %s37
      %s170 = sor.u32 %s168, %s169
      %p171 = scmp.eq.s32.totalorder %s170, 0
      %s173 = sadd.s32 %s172, 1
      %s174 = scalar_select %p171, %s172, %s173
      %p177 = pneg %p171
      %p178 = scmp.eq.s32.totalorder %s22, 1
      %p179 = por %p177, %p178
      %p180 = scmp.ne.s32.totalorder %s172, %s175
      %p181 = scmp.eq.s32.totalorder %s22, 0
      %p182 = por %p180, %p181
      %p183 = scmp.ne.s32.totalorder %s172, %s175
      %p184 = scmp.eq.s32.totalorder %s27, 1
      %p185 = por %p183, %p184
      %p186 = scmp.ne.s32.totalorder %s175, %s176
      %p187 = scmp.eq.s32.totalorder %s27, 0
      %p188 = por %p186, %p187
      %p189 = scmp.ne.s32.totalorder %s175, %s176
      %p190 = scmp.eq.s32.totalorder %s28, 1
      %p191 = por %p189, %p190
      %p193 = scmp.ne.s32.totalorder %s176, %s192
      %p194 = scmp.eq.s32.totalorder %s28, 0
      %p195 = por %p193, %p194
      %p196 = scmp.le.s32.totalorder 1, %s22
      %p197 = scmp.lt.s32.totalorder %s22, 3
      %p198 = pnand %p196, %p197
      %p199 = pneg %p198
      // Predicated region
      $region9: #{tpu_custom_call.1} parent=5 // pred_check
        _
      $region10: #{tpu_custom_call.1} parent=5 // pred_check_branch
        %201 = sbr.rel (%p198) target = $region12
      $region11: #{tpu_custom_call.1} parent=5 // pred_region
        %s202 = ssub.s32 %s22, 1
        // Predicated region
        $region13: #{tpu_custom_call.1} parent=11 // pred_check
          %p203 = pneg %p83
        $region14: #{tpu_custom_call.1} parent=11 // pred_check_branch
          %205 = sbr.rel (%p203) target = $region16
        $region15: #{tpu_custom_call.1} parent=11 // pred_region
          %s207 = ssub.s32 256, 256
          %208 = vsyncadd [#allocation6], %s207
          %s209 = sshll.u32 [#allocation5], 4
          %s210 = int_to_ptr.vmem [resolvable:$true] %s209
          %215 = dma.hbm_to_vmem [thread:$0]  %s1, 256, %s210, [#allocation6], 64, 64, 4
        $region16: #{tpu_custom_call.1} parent=11 // pred_fallthru
          _
        // Predicated region
        $region17: #{tpu_custom_call.1} parent=11 // pred_check
          %p216 = pneg %p104
        $region18: #{tpu_custom_call.1} parent=11 // pred_check_branch
          %218 = sbr.rel (%p216) target = $region20
        $region19: #{tpu_custom_call.1} parent=11 // pred_region
          %s220 = ssub.s32 16, 16
          %221 = vsyncadd [#allocation6], %s220
          %s223 = sshll.u32 [#allocation7], 4
          %s224 = int_to_ptr.vmem [resolvable:$true] %s223
          %226 = dma.hbm_to_vmem [thread:$0]  %s2, 16, %s224, [#allocation6]
        $region20: #{tpu_custom_call.1} parent=11 // pred_fallthru
          _
      $region12: #{tpu_custom_call.1} parent=5 // pred_fallthru
        _
      %p227 = scmp.lt.s32.totalorder %s22, 2
      // Predicated region
      $region21: #{tpu_custom_call.1} parent=5 // pred_check
        %p228 = pneg %p227
      $region22: #{tpu_custom_call.1} parent=5 // pred_check_branch
        %230 = sbr.rel (%p228) target = $region24
      $region23: #{tpu_custom_call.1} parent=5 // pred_region
        // Predicated region
        $region25: #{tpu_custom_call.1} parent=23 // pred_check
          %p231 = pneg %p56
        $region26: #{tpu_custom_call.1} parent=23 // pred_check_branch
          %233 = sbr.rel (%p231) target = $region28
        $region27: #{tpu_custom_call.1} parent=23 // pred_region
          %s234 = sand.u32 %s46, 1
          %s235 = scalar_lea.sflag [#allocation3], %s234
          %s236 = sand.u32 %s46, 1
          %s237 = smul.addr %s236, 8
          %s238 = scalar_lea.vmem [#allocation2], %s237
          %s240 = ssub.s32 128, 128
          %241 = vsyncadd %s235, %s240
          %s242 = sadd.s32 %s30, %s29
          %s243 = smul.addr %s242, 128
          %s244 = scalar_lea.hbm %s0, %s243
          %s246 = sshll.u32 %s238, 4
          %s247 = int_to_ptr.vmem [resolvable:$true] %s246
          %249 = dma.hbm_to_vmem [thread:$0]  %s244, 128, %s247, %s235
        $region28: #{tpu_custom_call.1} parent=23 // pred_fallthru
          _
      $region24: #{tpu_custom_call.1} parent=5 // pred_fallthru
        _
      %p250 = scmp.le.s32.totalorder 1, %s22
      %p251 = scmp.lt.s32.totalorder %s22, 3
      %p252 = pnand %p250, %p251
      %p253 = pneg %p252
      // Predicated region
      $region29: #{tpu_custom_call.1} parent=5 // pred_check
        _
      $region30: #{tpu_custom_call.1} parent=5 // pred_check_branch
        %255 = sbr.rel (%p252) target = $region32
      $region31: #{tpu_custom_call.1} parent=5 // pred_region
        %s256 = ssub.s32 %s22, 1
        %s257 = sand.u32 %s49, 1
        %s258 = scalar_lea.sflag [#allocation3], %s257
        %s259 = sand.u32 %s49, 1
        %s260 = smul.addr %s259, 8
        %s261 = scalar_lea.vmem [#allocation2], %s260
        // Predicated region
        $region33: #{tpu_custom_call.1} parent=31 // pred_check
          %p262 = pneg %p62
        $region34: #{tpu_custom_call.1} parent=31 // pred_check_branch
          %264 = sbr.rel (%p262) target = $region36
        $region35: #{tpu_custom_call.1} parent=31 // pred_region
          %265 = dma.done %s258, 128
        $region36: #{tpu_custom_call.1} parent=31 // pred_fallthru
          _
        // Predicated region
        $region37: #{tpu_custom_call.1} parent=31 // pred_check
          %p266 = pneg %p83
        $region38: #{tpu_custom_call.1} parent=31 // pred_check_branch
          %268 = sbr.rel (%p266) target = $region40
        $region39: #{tpu_custom_call.1} parent=31 // pred_region
          %269 = dma.done [#allocation6], 256
        $region40: #{tpu_custom_call.1} parent=31 // pred_fallthru
          _
        // Predicated region
        $region41: #{tpu_custom_call.1} parent=31 // pred_check
          %p270 = pneg %p104
        $region42: #{tpu_custom_call.1} parent=31 // pred_check_branch
          %272 = sbr.rel (%p270) target = $region44
        $region43: #{tpu_custom_call.1} parent=31 // pred_region
          %273 = dma.done [#allocation6], 16
        $region44: #{tpu_custom_call.1} parent=31 // pred_fallthru
          _
        %s274 = sand.u32 %s49, 1
        %s275 = scalar_lea.sflag [#allocation3], %s274
        %s276 = sand.u32 %s49, 1
        %s277 = smul.addr %s276, 8
        %s278 = scalar_lea.vmem [#allocation2], %s277
        %p279 = pneg %p62
        %p280 = pneg %p59
        %p281 = pneg %p83
        %p282 = pneg %p80
        %p283 = pneg %p104
        %p284 = pneg %p101
        %p285 = pneg %p132
        %p286 = pneg %p129
        %s287 = sand.u32 %s119, 1
        %s288 = scalar_lea.sflag [#allocation4], %s287
        %s289 = sand.u32 %s119, 1
        %s290 = smul.addr %s289, 16
        %s291 = scalar_lea.vmem [#allocation8], %s290
        %p292 = pneg %p160
        %p293 = pneg %p157
        %s294 = sand.u32 %s27, 1
        %s295 = scalar_lea.sflag [#allocation10], %s294
        %s296 = sand.u32 %s147, 1
        %s297 = smul.addr %s296, 16
        %s298 = scalar_lea.vmem [#allocation9], %s297
        %p299 = pneg %p188
        %p300 = pneg %p185
        %s301 = sand.u32 %s27, 1
        %s302 = scalar_lea.sflag [#allocation10], %s301
        %s303 = sand.u32 %s175, 1
        %s304 = smul.addr %s303, 16
        %s305 = scalar_lea.vmem [#allocation11], %s304
        %v307 = vld [vmem:[%s261] sm:$0xff]
        %v308 = vpack.c.bf16 %v307, %v307
        %v309 = vld [vmem:[#allocation5] sm:$0xf]
        %v310 = vld [vmem:[#allocation5 + $0x4] sm:$0xf]
        %v311 = vld [vmem:[#allocation5 + $0x8] sm:$0xf]
        %v312 = vld [vmem:[#allocation5 + $0xc] sm:$0xf]
        %v313 = vld [vmem:[#allocation7] sm:$0x1]
        %v315 = vlaneseq
        %v316 = vshrl.u32 %v315, 7
        %v317 = vsub.s32 0, %v316
        %v318 = vrot.slane %v313, %v317
        %v324 = vunpack.c.l.b16 %v309
        %v325 = vunpack.c.l.b16 %v310
        %v326 = vunpack.c.l.b16 %v311
        %v327 = vunpack.c.l.b16 %v312
        %v328 = vpack.c.b16 %v325, %v324
        %v329 = vpack.c.b16 %v327, %v326
        %vm332 = vcmask 261120
        %v334 = vsel %vm332, %v308, 0
        %336 = vmatprep.subr.bf16.mxu0 0
        %337 = vmatpush1.bf16.msra.mxu0 %v328
        %338 = vmatprep.subr.bf16.mxu0 0
        %339 = vmatpush1.bf16.msra.mxu0 %v329
        %340 = vmatprep.subr.bf16.mxu0 0
        %341 = vmatpush1.bf16.msra.mxu0 0
        %342 = vmatprep.subr.bf16.mxu0 0
        %343 = vmatpush1.bf16.msra.mxu0 0
        %344 = vmatprep.subr.bf16.mxu0 0
        %345 = vmatpush1.bf16.msra.mxu0 0
        %346 = vmatprep.subr.bf16.mxu0 0
        %347 = vmatpush1.bf16.msra.mxu0 0
        %348 = vmatprep.subr.bf16.mxu0 0
        %349 = vmatpush1.bf16.msra.mxu0 0
        %350 = vmatprep.subr.bf16.mxu0 0
        %351 = vmatpush1.bf16.msra.mxu0 0
        %352 = vmatprep.subr.bf16.mxu0 0
        %353 = vmatpush1.bf16.msra.mxu0 0
        %354 = vmatprep.subr.bf16.mxu0 0
        %355 = vmatpush1.bf16.msra.mxu0 0
        %356 = vmatprep.subr.bf16.mxu0 0
        %357 = vmatpush1.bf16.msra.mxu0 0
        %358 = vmatprep.subr.bf16.mxu0 0
        %359 = vmatpush1.bf16.msra.mxu0 0
        %360 = vmatprep.subr.bf16.mxu0 0
        %361 = vmatpush1.bf16.msra.mxu0 0
        %362 = vmatprep.subr.bf16.mxu0 0
        %363 = vmatpush1.bf16.msra.mxu0 0
        %364 = vmatprep.subr.bf16.mxu0 0
        %365 = vmatpush1.bf16.msra.mxu0 0
        %366 = vmatprep.subr.bf16.mxu0 0
        %367 = vmatpush1.bf16.msra.mxu0 0
        %368 = vmatprep.mubr.bf16.mxu0 0
        %369 = vmatmul.mubr.bf16.gmra.mrb[0].mxu0 %v334
        %v370 = vpop.f32.mrb[0].mxu0
        %v371 = vadd.f32 %v318, %v370
        %v372 = vpop.f32.mrb[0].mxu0
        %v373 = vpop.f32.mrb[0].mxu0
        %v374 = vpop.f32.mrb[0].mxu0
        %375 = vdwg.mxu0
        %v376 = vpack.c.bf16 %v371, %v371
        %vm377 = vcmask 60416
        %378 = vst.msk [vmem:[%s291] sm:$0xf] %vm377, %v376
        %v380 = vunpack.c.l.b16 %v376
        %v381 = vpack.c.b16 %v380, %v380
        %382 = vrot.lane.b32.xlu0 %v381, 96
        %v383 = vpop.permute.xlu0 %382
        %385 = vst.msk [vmem:[%s298] sm:$0xf] %vm377, %v383
        %386 = vrot.lane.b32.xlu0 %v381, 64
        %v387 = vpop.permute.xlu0 %386
        %389 = vst.msk [vmem:[%s305] sm:$0xf] %vm377, %v387
        %390 = vrot.lane.b32.xlu0 %v381, 120
        %v391 = vpop.permute.xlu0 %390
        %s393 = scalar_lea.vmem %s291, 4 [#allocation8]
        %394 = vst.msk [vmem:[%s393] sm:$0xf] %vm377, %v391
        %395 = vrot.lane.b32.xlu0 %v381, 88
        %v396 = vpop.permute.xlu0 %395
        %s398 = scalar_lea.vmem %s298, 4 [#allocation9]
        %399 = vst.msk [vmem:[%s398] sm:$0xf] %vm377, %v396
        %400 = vrot.lane.b32.xlu0 %v381, 56
        %v401 = vpop.permute.xlu0 %400
        %s403 = scalar_lea.vmem %s305, 4 [#allocation11]
        %404 = vst.msk [vmem:[%s403] sm:$0xf] %vm377, %v401
        %405 = vrot.lane.b32.xlu0 %v381, 112
        %v406 = vpop.permute.xlu0 %405
        %s408 = scalar_lea.vmem %s291, 8 [#allocation8]
        %409 = vst.msk [vmem:[%s408] sm:$0xf] %vm377, %v406
        %410 = vrot.lane.b32.xlu0 %v381, 80
        %v411 = vpop.permute.xlu0 %410
        %s413 = scalar_lea.vmem %s298, 8 [#allocation9]
        %414 = vst.msk [vmem:[%s413] sm:$0xf] %vm377, %v411
        %415 = vrot.lane.b32.xlu0 %v381, 48
        %v416 = vpop.permute.xlu0 %415
        %s418 = scalar_lea.vmem %s305, 8 [#allocation11]
        %419 = vst.msk [vmem:[%s418] sm:$0xf] %vm377, %v416
        %420 = vrot.lane.b32.xlu0 %v381, 104
        %v421 = vpop.permute.xlu0 %420
        %s423 = scalar_lea.vmem %s291, 12 [#allocation8]
        %424 = vst.msk [vmem:[%s423] sm:$0xf] %vm377, %v421
        %425 = vrot.lane.b32.xlu0 %v381, 72
        %v426 = vpop.permute.xlu0 %425
        %s428 = scalar_lea.vmem %s298, 12 [#allocation9]
        %429 = vst.msk [vmem:[%s428] sm:$0xf] %vm377, %v426
        %430 = vrot.lane.b32.xlu0 %v381, 40
        %v431 = vpop.permute.xlu0 %430
        %s433 = scalar_lea.vmem %s305, 12 [#allocation11]
        %434 = vst.msk [vmem:[%s433] sm:$0xf] %vm377, %v431
        %s435 = sand.u32 %s119, 1
        %s436 = scalar_lea.sflag [#allocation4], %s435
        %s437 = sand.u32 %s119, 1
        %s438 = smul.addr %s437, 16
        %s439 = scalar_lea.vmem [#allocation8], %s438
        %s440 = sand.u32 %s27, 1
        %s441 = scalar_lea.sflag [#allocation10], %s440
        %s442 = sand.u32 %s147, 1
        %s443 = smul.addr %s442, 16
        %s444 = scalar_lea.vmem [#allocation9], %s443
        %s445 = sand.u32 %s27, 1
        %s446 = scalar_lea.sflag [#allocation10], %s445
        %s447 = sand.u32 %s175, 1
        %s448 = smul.addr %s447, 16
        %s449 = scalar_lea.vmem [#allocation11], %s448
        // Predicated region
        $region45: #{tpu_custom_call.1} parent=31 // pred_check
          %p450 = pneg %p129
        $region46: #{tpu_custom_call.1} parent=31 // pred_check_branch
          %452 = sbr.rel (%p450) target = $region48
        $region47: #{tpu_custom_call.1} parent=31 // pred_region
          %s454 = ssub.s32 256, 256
          %455 = vsyncadd %s436, %s454
          %s456 = smul.addr %s31, 4
          %s457 = sadd.s32 %s32, %s456
          %s458 = smul.addr %s457, 64
          %s459 = scalar_lea.hbm %s3, %s458
          %s460 = sshll.u32 %s439, 4
          %s461 = int_to_ptr.vmem [resolvable:$true] %s460
          %466 = dma.vmem_to_hbm [thread:$0]  %s461, 256, %s459, %s436, 64, 64, 4
        $region48: #{tpu_custom_call.1} parent=31 // pred_fallthru
          _
        // Predicated region
        $region49: #{tpu_custom_call.1} parent=31 // pred_check
          %p467 = pneg %p157
        $region50: #{tpu_custom_call.1} parent=31 // pred_check_branch
          %469 = sbr.rel (%p467) target = $region52
        $region51: #{tpu_custom_call.1} parent=31 // pred_region
          %s471 = ssub.s32 256, 256
          %472 = vsyncadd %s441, %s471
          %s473 = smul.addr %s31, 4
          %s474 = sadd.s32 %s32, %s473
          %s475 = smul.addr %s474, 64
          %s476 = scalar_lea.hbm %s4, %s475
          %s477 = sshll.u32 %s444, 4
          %s478 = int_to_ptr.vmem [resolvable:$true] %s477
          %483 = dma.vmem_to_hbm [thread:$0]  %s478, 256, %s476, %s441, 64, 64, 4
        $region52: #{tpu_custom_call.1} parent=31 // pred_fallthru
          _
        // Predicated region
        $region53: #{tpu_custom_call.1} parent=31 // pred_check
          %p484 = pneg %p185
        $region54: #{tpu_custom_call.1} parent=31 // pred_check_branch
          %486 = sbr.rel (%p484) target = $region56
        $region55: #{tpu_custom_call.1} parent=31 // pred_region
          %s488 = ssub.s32 256, 256
          %489 = vsyncadd %s446, %s488
          %s490 = smul.addr %s31, 4
          %s491 = sadd.s32 %s32, %s490
          %s492 = smul.addr %s491, 64
          %s493 = scalar_lea.hbm %s5, %s492
          %s494 = sshll.u32 %s449, 4
          %s495 = int_to_ptr.vmem [resolvable:$true] %s494
          %500 = dma.vmem_to_hbm [thread:$0]  %s495, 256, %s493, %s446, 64, 64, 4
        $region56: #{tpu_custom_call.1} parent=31 // pred_fallthru
          _
      $region32: #{tpu_custom_call.1} parent=5 // pred_fallthru
        _
      %p501 = scmp.le.s32.totalorder 2, %s22
      // Predicated region
      $region57: #{tpu_custom_call.1} parent=5 // pred_check
        %p502 = pneg %p501
      $region58: #{tpu_custom_call.1} parent=5 // pred_check_branch
        %504 = sbr.rel (%p502) target = $region60
      $region59: #{tpu_custom_call.1} parent=5 // pred_region
        %s505 = ssub.s32 %s22, 2
        // Predicated region
        $region61: #{tpu_custom_call.1} parent=59 // pred_check
          %p506 = pneg %p135
        $region62: #{tpu_custom_call.1} parent=59 // pred_check_branch
          %508 = sbr.rel (%p506) target = $region64
        $region63: #{tpu_custom_call.1} parent=59 // pred_region
          %s509 = sand.u32 %s120, 1
          %s510 = scalar_lea.sflag [#allocation4], %s509
          %s511 = sand.u32 %s120, 1
          %s512 = smul.addr %s511, 16
          %s513 = scalar_lea.vmem [#allocation8], %s512
          %514 = dma.done %s510, 256
        $region64: #{tpu_custom_call.1} parent=59 // pred_fallthru
          _
        // Predicated region
        $region65: #{tpu_custom_call.1} parent=59 // pred_check
          %p515 = pneg %p163
        $region66: #{tpu_custom_call.1} parent=59 // pred_check_branch
          %517 = sbr.rel (%p515) target = $region68
        $region67: #{tpu_custom_call.1} parent=59 // pred_region
          %s518 = sand.u32 %s28, 1
          %s519 = scalar_lea.sflag [#allocation10], %s518
          %s520 = sand.u32 %s148, 1
          %s521 = smul.addr %s520, 16
          %s522 = scalar_lea.vmem [#allocation9], %s521
          %523 = dma.done %s519, 256
        $region68: #{tpu_custom_call.1} parent=59 // pred_fallthru
          _
        // Predicated region
        $region69: #{tpu_custom_call.1} parent=59 // pred_check
          %p524 = pneg %p191
        $region70: #{tpu_custom_call.1} parent=59 // pred_check_branch
          %526 = sbr.rel (%p524) target = $region72
        $region71: #{tpu_custom_call.1} parent=59 // pred_region
          %s527 = sand.u32 %s28, 1
          %s528 = scalar_lea.sflag [#allocation10], %s527
          %s529 = sand.u32 %s176, 1
          %s530 = smul.addr %s529, 16
          %s531 = scalar_lea.vmem [#allocation11], %s530
          %532 = dma.done %s528, 256
        $region72: #{tpu_custom_call.1} parent=59 // pred_fallthru
          _
      $region60: #{tpu_custom_call.1} parent=5 // pred_fallthru
        _
    $region6: #{tpu_custom_call.1} parent=1 // loop_footer
      %s26 = sadd.s32 1, %s22
    $region7: #{tpu_custom_call.1} parent=1 // loop_footer_branch
      %21 = sbr.rel target = $region3
    $region8: #{tpu_custom_call.1} parent=1 // loop_exit
      _
    %533 = vsyncpa [#allocation3], 1
    %s534 = scalar_lea.sflag [#allocation3], 1
    %535 = vsyncpa %s534, 1
    %536 = vsyncpa [#allocation6], 1
    %537 = vsyncpa [#allocation4], 1
    %s538 = scalar_lea.sflag [#allocation4], 1
    %539 = vsyncpa %s538, 1
    %540 = vsyncpa [#allocation10], 1
    %s541 = scalar_lea.sflag [#allocation10], 1
    %542 = vsyncpa %s541, 1

</llo_original>
